<compile_context>
chip_gen: v7x
topology: tpu7x:2x2x1
jax: 0.10.0
libtpu: 0.0.40
codegen_flags: <defaults>
</compile_context>

<pallas_src>
import jax
import jax.numpy as jnp
from jax import lax
from jax.experimental import pallas as pl
from jax.experimental.pallas import tpu as pltpu

_LANES = 128


def _round_up(v, m):
    return ((v + m - 1) // m) * m


def _linear_sigmoid_kernel(x_ref, s_ref, b_ref, o_ref):
    # x_ref: (TR, 384) VMEM — 128 batch elements per row, features interleaved.
    # s_ref: (384, 128) VMEM — structured de-interleave weight, resident all steps.
    # b_ref: (1,)       SMEM scalar bias.
    # o_ref: (TR, 128)  VMEM — one sigmoid per batch element, lane-dense store.
    z = jnp.dot(x_ref[...], s_ref[...],
                preferred_element_type=jnp.float32,
                precision=lax.Precision.HIGHEST) + b_ref[0]
    # exp on the EUP; exact divide keeps the 1e-5 tolerance (approx recip optional).
    o_ref[...] = (1.0 / (1.0 + jnp.exp(-z))).astype(o_ref.dtype)


def custom_model_forward(x, weight, bias, *, block_rows=2048):
    """sigmoid(x @ weight + bias);  x:(N,3), weight:(3,1), bias:(1,1)/(1,) -> (N,1)."""
    n, k = x.shape                      # k == 3
    out_features = weight.shape[-1]     # == 1
    dtype = x.dtype
    itemsize = jnp.dtype(dtype).itemsize
    sub = max(8, 32 // itemsize)        # min sublane tile: 8 f32 / 16 bf16 / 32 int8

    # Pack 128 batch elements per packed row.  Free reshape when n % 128 == 0;
    # ragged batches pad (the only copy) up to a 128*sub multiple so even tiny
    # batches form full (sub, 384) tiles.
    if n % _LANES == 0:
        n_pad = n
    else:
        n_pad = _round_up(n, _LANES * sub)
        x = jnp.pad(x, ((0, n_pad - n), (0, 0)))
    r = n_pad // _LANES
    xv = x.reshape(r, k * _LANES)       # contiguous view, no data movement

    # Row tile: aim for >= 8 grid steps (pipelining + 2-TC sharding on v7x) while
    # capping each step's input tile at block_rows rows (~3 MiB f32 at 2048 rows).
    tr = min(_round_up(block_rows, sub), _round_up(pl.cdiv(r, 8), sub))
    tr = max(tr, sub)
    grid = (pl.cdiv(r, tr),)            # ragged last block handled by masked DMA

    # Structured weight: S[l, c] = w[l % 3] if c == l // 3 else 0, so
    # (TR,384) @ S de-interleaves and reduces the 3 features of each of the 128
    # batch elements into its own output lane in a single MXU pass.
    w_flat = weight.reshape(-1).astype(jnp.float32)                    # (3,)
    lane = jnp.arange(k * _LANES)
    s = jnp.where((lane // k)[:, None] == jnp.arange(_LANES)[None, :],
                  w_flat[lane % k][:, None], 0.0).astype(dtype)        # (384, 128)
    b_s = bias.reshape(-1).astype(jnp.float32)                          # (1,) -> SMEM

    out_packed = pl.pallas_call(
        _linear_sigmoid_kernel,
        out_shape=jax.ShapeDtypeStruct((r, _LANES), dtype),
        grid_spec=pltpu.PrefetchScalarGridSpec(
            num_scalar_prefetch=0,
            grid=grid,
            in_specs=[
                # x tile: TR packed rows x 384 lanes.
                pl.BlockSpec((tr, k * _LANES), lambda i: (i, 0)),
                # structured weight: constant block index -> DMA'd once, stays in VMEM.
                pl.BlockSpec((k * _LANES, _LANES), lambda i: (0, 0)),
                # bias scalar in SMEM (no VMEM tile for one value).
                pl.BlockSpec(memory_space=pltpu.MemorySpace.SMEM),
            ],
            out_specs=pl.BlockSpec((tr, _LANES), lambda i: (i, 0)),
        ),
        compiler_params=pltpu.CompilerParams(
            # Disjoint output tile per step -> megacore / v7x dual-TC sharding.
            dimension_semantics=("parallel",),
        ),
    )(xv, s, b_s)

    flat = out_packed.reshape(-1)        # free (contiguous)
    if n_pad != n:
        flat = flat[:n]                  # slice copy only for ragged batches
    return flat.reshape(n, out_features)  # free


if __name__ == "__main__":
    key = jax.random.PRNGKey(0)
    kx1, kw, kb, kx2, kx3 = jax.random.split(key, 5)

    in_features, out_features = 3, 1
    bound = 1.0 / (in_features ** 0.5)   # PyTorch nn.Linear default init bound

    weight = jax.random.uniform(kw, (in_features, out_features),
                                minval=-bound, maxval=bound, dtype=jnp.float32)
    bias = jax.random.uniform(kb, (1, out_features),
                              minval=-bound, maxval=bound, dtype=jnp.float32)

    def ref_fn(xi):
        return jax.nn.sigmoid(
            jnp.dot(xi, weight, precision=lax.Precision.HIGHEST) + bias)

    # 1) tiny batch: single (8,384) tile, padded input, sliced output.
    x1 = jax.random.normal(kx1, (8, in_features), dtype=jnp.float32)
    o1 = custom_model_forward(x1, weight, bias)
    jax.block_until_ready(o1)
    assert o1.shape == (8, out_features)
    assert jnp.allclose(o1, ref_fn(x1), atol=1e-5), "mismatch (tiny batch)"

    # 2) batch multiple of 128: zero-copy reshape path, multi-step pipelined grid.
    x2 = jax.random.normal(kx2, (4096, in_features), dtype=jnp.float32)
    o2 = custom_model_forward(x2, weight, bias)
    jax.block_until_ready(o2)
    assert o2.shape == (4096, out_features)
    assert jnp.allclose(o2, ref_fn(x2), atol=1e-5), "mismatch (multiple-of-128 batch)"

    # 3) ragged batch: padded input, multi-step grid, trailing slice only here.
    x3 = jax.random.normal(kx3, (2048 + 37, in_features), dtype=jnp.float32)
    o3 = custom_model_forward(x3, weight, bias)
    jax.block_until_ready(o3)
    assert o3.shape == (2048 + 37, out_features)
    assert jnp.allclose(o3, ref_fn(x3), atol=1e-5), "mismatch (ragged batch)"

    print("KERNEL_OK")
</pallas_src>

<mosaic_0001>
module attributes {stable_mosaic.version = 11 : i64} {
  func.func @_linear_sigmoid_kernel(%arg0: i32, %arg1: memref<8x384xf32, #tpu.memory_space<vmem>>, %arg2: memref<384x128xf32, #tpu.memory_space<vmem>>, %arg3: memref<1xf32, #tpu.memory_space<smem>>, %arg4: memref<8x128xf32, #tpu.memory_space<vmem>>) attributes {dimension_semantics = [#tpu.dimension_semantics<parallel>], iteration_bounds = array<i64: 1>, scalar_prefetch = 0 : i64, scratch_operands = 0 : i64, tpu.core_type = #tpu.core_type<tc>, window_params = [{transform_indices = @transform_0, window_bounds = array<i64: 8, 384>}, {pipeline_mode = #tpu.pipeline_mode<synchronous>, transform_indices = @transform_1, window_bounds = array<i64: 384, 128>}, {transform_indices = @transform_2, window_bounds = array<i64: 1>}, {transform_indices = @transform_3, window_bounds = array<i64: 8, 128>}]} {
    %c0 = arith.constant 0 : index
    %c0_0 = arith.constant 0 : index
    %0 = vector.load %arg1[%c0, %c0_0] : memref<8x384xf32, #tpu.memory_space<vmem>>, vector<8x384xf32>
    %c0_1 = arith.constant 0 : index
    %c0_2 = arith.constant 0 : index
    %1 = vector.load %arg2[%c0_1, %c0_2] : memref<384x128xf32, #tpu.memory_space<vmem>>, vector<384x128xf32>
    %cst = arith.constant dense<0.000000e+00> : vector<8x128xf32>
    %2 = tpu.matmul %0, %1, %cst {dimension_numbers = #tpu.dot_dimension_numbers<[1], [0], [0], [1], [0, 0, 1, 1], [], []>, precision = #tpu.contract_precision<fp32>} : vector<8x384xf32>, vector<384x128xf32>, vector<8x128xf32> -> vector<8x128xf32>
    %c0_3 = arith.constant 0 : index
    %3 = memref.load %arg3[%c0_3] : memref<1xf32, #tpu.memory_space<smem>>
    %4 = vector.broadcast %3 : f32 to vector<8x128xf32>
    %5 = arith.addf %2, %4 : vector<8x128xf32>
    %cst_4 = arith.constant 0.000000e+00 : f32
    %6 = vector.broadcast %cst_4 : f32 to vector<8x128xf32>
    %7 = arith.subf %6, %5 : vector<8x128xf32>
    %8 = math.exp %7 : vector<8x128xf32>
    %cst_5 = arith.constant 1.000000e+00 : f32
    %9 = vector.broadcast %cst_5 : f32 to vector<8x128xf32>
    %10 = arith.addf %9, %8 : vector<8x128xf32>
    %cst_6 = arith.constant 1.000000e+00 : f32
    %11 = vector.broadcast %cst_6 : f32 to vector<8x128xf32>
    %12 = arith.divf %11, %10 : vector<8x128xf32>
    %c0_7 = arith.constant 0 : index
    %c0_8 = arith.constant 0 : index
    %13 = vector.load %arg4[%c0_7, %c0_8] : memref<8x128xf32, #tpu.memory_space<vmem>>, vector<8x128xf32>
    tpu.vector_store %arg4[%c0_7, %c0_8], %12 {strides = array<i32>} : memref<8x128xf32, #tpu.memory_space<vmem>>, vector<8x128xf32>,
    return
  }
  func.func @transform_0(%arg0: i32) -> (i32, i32) {
    %c0_i32 = arith.constant 0 : i32
    %c0_i32_0 = arith.constant 0 : i32
    return %arg0, %c0_i32 : i32, i32
  }
  func.func @transform_1(%arg0: i32) -> (i32, i32) {
    %c0_i32 = arith.constant 0 : i32
    %c0_i32_0 = arith.constant 0 : i32
    %c0_i32_1 = arith.constant 0 : i32
    return %c0_i32, %c0_i32_0 : i32, i32
  }
  func.func @transform_2(%arg0: i32) -> i32 {
    %c0_i32 = arith.constant 0 : i32
    %c0_i32_0 = arith.constant 0 : i32
    return %c0_i32 : i32
  }
  func.func @transform_3(%arg0: i32) -> (i32, i32) {
    %c0_i32 = arith.constant 0 : i32
    %c0_i32_0 = arith.constant 0 : i32
    return %arg0, %c0_i32 : i32, i32
  }
}

</mosaic_0001>

<llo_original>
// kernel: tpu_custom_call.1
$region0: #{tpu_custom_call.1}
  #allocation0 [shape = 'u32[]', space=smem, size = 0x4, offset = 0x4, fixed_abs, tag = 'smem constant byte address 0x4 - core index']
  #allocation1 [shape = 'u32[144,128]{1,0:T(1,128)}', space=vmem, size = 0x12000, scoped, tag = 'internal scratch']
  #allocation2 [shape = 'f32[1]{0:T(128)S(6)}', space=smem, size = 0x200, scoped, tag = 'scoped memory for tpu_custom_call.1']
  %s0 = inlined_call_operand.hbm [shape: f32[8,384], index: 0, kind: input, shape index: {}]
  %s1 = inlined_call_operand.hbm [shape: f32[384,128], index: 1, kind: input, shape index: {}]
  %s2 = inlined_call_operand.<no memory space> [shape: f32[1], index: 2, kind: input, shape index: {}]
  %s3 = inlined_call_operand.hbm [shape: f32[8,128], index: 3, kind: output, shape index: {}]
  %s4 = sld [smem:[#allocation0]]
  $region30: #{tpu_custom_call.1} parent=0
    _
  %s6 = ssub.s32 1, %s4
  %s7 = scalar_select 0, %s6, %s4
  %8 = sst [smem:[#allocation2]] %s2
  $region1: #{tpu_custom_call.1} parent=0
    #allocation3 [shape = 'u8[12288]{0}', space=vmem, size = 0x3000, scoped, tag = 'input window, operand 0, single buffered']
    #allocation4 [shape = 's32[1]{0}', space=sflag, size = 0x4, scoped, tag = 'scoped memory for tpu_custom_call.1']
    #allocation5 [shape = 's32[1]{0}', space=sflag, size = 0x4, scoped, tag = 'scoped memory for tpu_custom_call.1']
    #allocation6 [shape = 'u8[196608]{0}', space=vmem, size = 0x30000, scoped, tag = 'input window, operand 1, single buffered']
    #allocation7 [shape = 's32[1]{0}', space=sflag, size = 0x4, scoped, tag = 'scoped memory for tpu_custom_call.1']
    #allocation8 [shape = 'u8[4096]{0}', space=vmem, size = 0x1000, scoped, tag = 'output window, operand 0, single buffered']
    %9 = vsyncpa [#allocation4], 0
    %10 = vsyncpa [#allocation7], 0
    %11 = vsyncpa [#allocation5], 0
    // Predicated region
    $region2: #{tpu_custom_call.1} parent=1 // pred_check
      _
    $region3: #{tpu_custom_call.1} parent=1 // pred_check_branch
      %13 = sbr.rel (0) target = $region5
    $region4: #{tpu_custom_call.1} parent=1 // pred_region
      %s15 = ssub.s32 384, 384
      %16 = vsyncadd [#allocation4], %s15
      %s18 = sshll.u32 [#allocation3], 4
      %s19 = int_to_ptr.vmem [resolvable:$true] %s18
      %21 = dma.hbm_to_vmem [thread:$0]  %s0, 384, %s19, [#allocation4]
    $region5: #{tpu_custom_call.1} parent=1 // pred_fallthru
      _
    // Predicated region
    $region6: #{tpu_custom_call.1} parent=1 // pred_check
      _
    $region7: #{tpu_custom_call.1} parent=1 // pred_check_branch
      %23 = sbr.rel (0) target = $region9
    $region8: #{tpu_custom_call.1} parent=1 // pred_region
      %s25 = ssub.s32 6144, 6144
      %26 = vsyncadd [#allocation7], %s25
      %s27 = sshll.u32 [#allocation6], 4
      %s28 = int_to_ptr.vmem [resolvable:$true] %s27
      %33 = dma.hbm_to_vmem [thread:$0]  %s1, 6144, %s28, [#allocation7], 128, 128, 8
    $region9: #{tpu_custom_call.1} parent=1 // pred_fallthru
      _
    // Predicated region
    $region10: #{tpu_custom_call.1} parent=1 // pred_check
      _
    $region11: #{tpu_custom_call.1} parent=1 // pred_check_branch
      %35 = sbr.rel (0) target = $region13
    $region12: #{tpu_custom_call.1} parent=1 // pred_region
      _
    $region13: #{tpu_custom_call.1} parent=1 // pred_fallthru
      _
    // Predicated region
    $region14: #{tpu_custom_call.1} parent=1 // pred_check
      _
    $region15: #{tpu_custom_call.1} parent=1 // pred_check_branch
      %37 = sbr.rel (0) target = $region17
    $region16: #{tpu_custom_call.1} parent=1 // pred_region
      %38 = dma.done [#allocation4], 384
    $region17: #{tpu_custom_call.1} parent=1 // pred_fallthru
      _
    // Predicated region
    $region18: #{tpu_custom_call.1} parent=1 // pred_check
      _
    $region19: #{tpu_custom_call.1} parent=1 // pred_check_branch
      %40 = sbr.rel (0) target = $region21
    $region20: #{tpu_custom_call.1} parent=1 // pred_region
      %41 = dma.done [#allocation7], 6144
    $region21: #{tpu_custom_call.1} parent=1 // pred_fallthru
      _
    %v42 = vld [vmem:[#allocation3] sm:$0xff]
    %v43 = vld [vmem:[#allocation3 + $0x8] sm:$0xff]
    %v44 = vld [vmem:[#allocation3 + $0x10] sm:$0xff]
    %v45 = vld [vmem:[#allocation6] sm:$0xff]
    %v46 = vld [vmem:[#allocation6 + $0x8] sm:$0xff]
    %v47 = vld [vmem:[#allocation6 + $0x10] sm:$0xff]
    %v48 = vld [vmem:[#allocation6 + $0x18] sm:$0xff]
    %v49 = vld [vmem:[#allocation6 + $0x20] sm:$0xff]
    %v50 = vld [vmem:[#allocation6 + $0x28] sm:$0xff]
    %v51 = vld [vmem:[#allocation6 + $0x30] sm:$0xff]
    %v52 = vld [vmem:[#allocation6 + $0x38] sm:$0xff]
    %v53 = vld [vmem:[#allocation6 + $0x40] sm:$0xff]
    %v54 = vld [vmem:[#allocation6 + $0x48] sm:$0xff]
    %v55 = vld [vmem:[#allocation6 + $0x50] sm:$0xff]
    %v56 = vld [vmem:[#allocation6 + $0x58] sm:$0xff]
    %v57 = vld [vmem:[#allocation6 + $0x60] sm:$0xff]
    %v58 = vld [vmem:[#allocation6 + $0x68] sm:$0xff]
    %v59 = vld [vmem:[#allocation6 + $0x70] sm:$0xff]
    %v60 = vld [vmem:[#allocation6 + $0x78] sm:$0xff]
    %v61 = vld [vmem:[#allocation6 + $0x80] sm:$0xff]
    %v62 = vld [vmem:[#allocation6 + $0x88] sm:$0xff]
    %v63 = vld [vmem:[#allocation6 + $0x90] sm:$0xff]
    %v64 = vld [vmem:[#allocation6 + $0x98] sm:$0xff]
    %v65 = vld [vmem:[#allocation6 + $0xa0] sm:$0xff]
    %v66 = vld [vmem:[#allocation6 + $0xa8] sm:$0xff]
    %v67 = vld [vmem:[#allocation6 + $0xb0] sm:$0xff]
    %v68 = vld [vmem:[#allocation6 + $0xb8] sm:$0xff]
    %v69 = vld [vmem:[#allocation6 + $0xc0] sm:$0xff]
    %v70 = vld [vmem:[#allocation6 + $0xc8] sm:$0xff]
    %v71 = vld [vmem:[#allocation6 + $0xd0] sm:$0xff]
    %v72 = vld [vmem:[#allocation6 + $0xd8] sm:$0xff]
    %v73 = vld [vmem:[#allocation6 + $0xe0] sm:$0xff]
    %v74 = vld [vmem:[#allocation6 + $0xe8] sm:$0xff]
    %v75 = vld [vmem:[#allocation6 + $0xf0] sm:$0xff]
    %v76 = vld [vmem:[#allocation6 + $0xf8] sm:$0xff]
    %v77 = vld [vmem:[#allocation6 + $0x100] sm:$0xff]
    %v78 = vld [vmem:[#allocation6 + $0x108] sm:$0xff]
    %v79 = vld [vmem:[#allocation6 + $0x110] sm:$0xff]
    %v80 = vld [vmem:[#allocation6 + $0x118] sm:$0xff]
    %v81 = vld [vmem:[#allocation6 + $0x120] sm:$0xff]
    %v82 = vld [vmem:[#allocation6 + $0x128] sm:$0xff]
    %v83 = vld [vmem:[#allocation6 + $0x130] sm:$0xff]
    %v84 = vld [vmem:[#allocation6 + $0x138] sm:$0xff]
    %v85 = vld [vmem:[#allocation6 + $0x140] sm:$0xff]
    %v86 = vld [vmem:[#allocation6 + $0x148] sm:$0xff]
    %v87 = vld [vmem:[#allocation6 + $0x150] sm:$0xff]
    %v88 = vld [vmem:[#allocation6 + $0x158] sm:$0xff]
    %v89 = vld [vmem:[#allocation6 + $0x160] sm:$0xff]
    %v90 = vld [vmem:[#allocation6 + $0x168] sm:$0xff]
    %v91 = vld [vmem:[#allocation6 + $0x170] sm:$0xff]
    %v92 = vld [vmem:[#allocation6 + $0x178] sm:$0xff]
    %s93 = sld [smem:[#allocation2]]
    %v94 = vstv %s93
    %95 = vmatprep.subr.mxu0 0.0
    %v96 = vand.u32 %v45, 4294901760
    %97 = vmatpush1.msra.mxu0 %v96
    %98 = vmatprep.subr.mxu0 0.0
    %v99 = vand.u32 %v46, 4294901760
    %100 = vmatpush1.msra.mxu0 %v99
    %101 = vmatprep.subr.mxu0 0.0
    %v102 = vand.u32 %v47, 4294901760
    %103 = vmatpush1.msra.mxu0 %v102
    %104 = vmatprep.subr.mxu0 0.0
    %v105 = vand.u32 %v48, 4294901760
    %106 = vmatpush1.msra.mxu0 %v105
    %107 = vmatprep.subr.mxu0 0.0
    %v108 = vand.u32 %v49, 4294901760
    %109 = vmatpush1.msra.mxu0 %v108
    %110 = vmatprep.subr.mxu0 0.0
    %v111 = vand.u32 %v50, 4294901760
    %112 = vmatpush1.msra.mxu0 %v111
    %113 = vmatprep.subr.mxu0 0.0
    %v114 = vand.u32 %v51, 4294901760
    %115 = vmatpush1.msra.mxu0 %v114
    %116 = vmatprep.subr.mxu0 0.0
    %v117 = vand.u32 %v52, 4294901760
    %118 = vmatpush1.msra.mxu0 %v117
    %119 = vmatprep.subr.mxu0 0.0
    %v120 = vand.u32 %v53, 4294901760
    %121 = vmatpush1.msra.mxu0 %v120
    %122 = vmatprep.subr.mxu0 0.0
    %v123 = vand.u32 %v54, 4294901760
    %124 = vmatpush1.msra.mxu0 %v123
    %125 = vmatprep.subr.mxu0 0.0
    %v126 = vand.u32 %v55, 4294901760
    %127 = vmatpush1.msra.mxu0 %v126
    %128 = vmatprep.subr.mxu0 0.0
    %v129 = vand.u32 %v56, 4294901760
    %130 = vmatpush1.msra.mxu0 %v129
    %131 = vmatprep.subr.mxu0 0.0
    %v132 = vand.u32 %v57, 4294901760
    %133 = vmatpush1.msra.mxu0 %v132
    %134 = vmatprep.subr.mxu0 0.0
    %v135 = vand.u32 %v58, 4294901760
    %136 = vmatpush1.msra.mxu0 %v135
    %137 = vmatprep.subr.mxu0 0.0
    %v138 = vand.u32 %v59, 4294901760
    %139 = vmatpush1.msra.mxu0 %v138
    %140 = vmatprep.subr.mxu0 0.0
    %v141 = vand.u32 %v60, 4294901760
    %142 = vmatpush1.msra.mxu0 %v141
    %143 = vmatprep.subr.mxu0 0.0
    %v144 = vand.u32 %v61, 4294901760
    %145 = vmatpush1.msra.mxu0 %v144
    %146 = vmatprep.subr.mxu0 0.0
    %v147 = vand.u32 %v62, 4294901760
    %148 = vmatpush1.msra.mxu0 %v147
    %149 = vmatprep.subr.mxu0 0.0
    %v150 = vand.u32 %v63, 4294901760
    %151 = vmatpush1.msra.mxu0 %v150
    %152 = vmatprep.subr.mxu0 0.0
    %v153 = vand.u32 %v64, 4294901760
    %154 = vmatpush1.msra.mxu0 %v153
    %155 = vmatprep.subr.mxu0 0.0
    %v156 = vand.u32 %v65, 4294901760
    %157 = vmatpush1.msra.mxu0 %v156
    %158 = vmatprep.subr.mxu0 0.0
    %v159 = vand.u32 %v66, 4294901760
    %160 = vmatpush1.msra.mxu0 %v159
    %161 = vmatprep.subr.mxu0 0.0
    %v162 = vand.u32 %v67, 4294901760
    %163 = vmatpush1.msra.mxu0 %v162
    %164 = vmatprep.subr.mxu0 0.0
    %v165 = vand.u32 %v68, 4294901760
    %166 = vmatpush1.msra.mxu0 %v165
    %167 = vmatprep.subr.mxu0 0.0
    %v168 = vand.u32 %v69, 4294901760
    %169 = vmatpush1.msra.mxu0 %v168
    %170 = vmatprep.subr.mxu0 0.0
    %v171 = vand.u32 %v70, 4294901760
    %172 = vmatpush1.msra.mxu0 %v171
    %173 = vmatprep.subr.mxu0 0.0
    %v174 = vand.u32 %v71, 4294901760
    %175 = vmatpush1.msra.mxu0 %v174
    %176 = vmatprep.subr.mxu0 0.0
    %v177 = vand.u32 %v72, 4294901760
    %178 = vmatpush1.msra.mxu0 %v177
    %179 = vmatprep.subr.mxu0 0.0
    %v180 = vand.u32 %v73, 4294901760
    %181 = vmatpush1.msra.mxu0 %v180
    %182 = vmatprep.subr.mxu0 0.0
    %v183 = vand.u32 %v74, 4294901760
    %184 = vmatpush1.msra.mxu0 %v183
    %185 = vmatprep.subr.mxu0 0.0
    %v186 = vand.u32 %v75, 4294901760
    %187 = vmatpush1.msra.mxu0 %v186
    %188 = vmatprep.subr.mxu0 0.0
    %v189 = vand.u32 %v76, 4294901760
    %190 = vmatpush1.msra.mxu0 %v189
    %v191 = vand.u32 %v43, 4294901760
    %v192 = vsub.f32 %v43, %v191
    %v193 = vand.u32 %v192, 4294901760
    %v194 = vsub.f32 %v192, %v193
    %v195 = vand.u32 %v194, 4294901760
    %196 = vmatprep.mubr.f32.mxu0 %v195
    %v197 = vand.u32 %v42, 4294901760
    %v198 = vsub.f32 %v42, %v197
    %v199 = vand.u32 %v198, 4294901760
    %v200 = vsub.f32 %v198, %v199
    %v201 = vand.u32 %v200, 4294901760
    %202 = vmatmul.mubr.f32.gmra.mrb[0].mxu0 %v201
    %v203 = vpop.f32.mrb[0].mxu0
    %v204 = vadd.f32 %v94, %v203
    %v205 = vpop.f32.mrb[0].mxu0
    %206 = vdwg.mxu0
    %207 = vmatprep.subr.mxu0 0.0
    %v208 = vand.u32 %v45, 4294901760
    %v209 = vsub.f32 %v45, %v208
    %v210 = vand.u32 %v209, 4294901760
    %v211 = vsub.f32 %v209, %v210
    %v212 = vand.u32 %v211, 4294901760
    %213 = vmatpush1.msra.mxu0 %v212
    %214 = vmatprep.subr.mxu0 0.0
    %v215 = vand.u32 %v46, 4294901760
    %v216 = vsub.f32 %v46, %v215
    %v217 = vand.u32 %v216, 4294901760
    %v218 = vsub.f32 %v216, %v217
    %v219 = vand.u32 %v218, 4294901760
    %220 = vmatpush1.msra.mxu0 %v219
    %221 = vmatprep.subr.mxu0 0.0
    %v222 = vand.u32 %v47, 4294901760
    %v223 = vsub.f32 %v47, %v222
    %v224 = vand.u32 %v223, 4294901760
    %v225 = vsub.f32 %v223, %v224
    %v226 = vand.u32 %v225, 4294901760
    %227 = vmatpush1.msra.mxu0 %v226
    %228 = vmatprep.subr.mxu0 0.0
    %v229 = vand.u32 %v48, 4294901760
    %v230 = vsub.f32 %v48, %v229
    %v231 = vand.u32 %v230, 4294901760
    %v232 = vsub.f32 %v230, %v231
    %v233 = vand.u32 %v232, 4294901760
    %234 = vmatpush1.msra.mxu0 %v233
    %235 = vmatprep.subr.mxu0 0.0
    %v236 = vand.u32 %v49, 4294901760
    %v237 = vsub.f32 %v49, %v236
    %v238 = vand.u32 %v237, 4294901760
    %v239 = vsub.f32 %v237, %v238
    %v240 = vand.u32 %v239, 4294901760
    %241 = vmatpush1.msra.mxu0 %v240
    %242 = vmatprep.subr.mxu0 0.0
    %v243 = vand.u32 %v50, 4294901760
    %v244 = vsub.f32 %v50, %v243
    %v245 = vand.u32 %v244, 4294901760
    %v246 = vsub.f32 %v244, %v245
    %v247 = vand.u32 %v246, 4294901760
    %248 = vmatpush1.msra.mxu0 %v247
    %249 = vmatprep.subr.mxu0 0.0
    %v250 = vand.u32 %v51, 4294901760
    %v251 = vsub.f32 %v51, %v250
    %v252 = vand.u32 %v251, 4294901760
    %v253 = vsub.f32 %v251, %v252
    %v254 = vand.u32 %v253, 4294901760
    %255 = vmatpush1.msra.mxu0 %v254
    %256 = vmatprep.subr.mxu0 0.0
    %v257 = vand.u32 %v52, 4294901760
    %v258 = vsub.f32 %v52, %v257
    %v259 = vand.u32 %v258, 4294901760
    %v260 = vsub.f32 %v258, %v259
    %v261 = vand.u32 %v260, 4294901760
    %262 = vmatpush1.msra.mxu0 %v261
    %263 = vmatprep.subr.mxu0 0.0
    %v264 = vand.u32 %v53, 4294901760
    %v265 = vsub.f32 %v53, %v264
    %v266 = vand.u32 %v265, 4294901760
    %v267 = vsub.f32 %v265, %v266
    %v268 = vand.u32 %v267, 4294901760
    %269 = vmatpush1.msra.mxu0 %v268
    %270 = vmatprep.subr.mxu0 0.0
    %v271 = vand.u32 %v54, 4294901760
    %v272 = vsub.f32 %v54, %v271
    %v273 = vand.u32 %v272, 4294901760
    %v274 = vsub.f32 %v272, %v273
    %v275 = vand.u32 %v274, 4294901760
    %276 = vmatpush1.msra.mxu0 %v275
    %277 = vmatprep.subr.mxu0 0.0
    %v278 = vand.u32 %v55, 4294901760
    %v279 = vsub.f32 %v55, %v278
    %v280 = vand.u32 %v279, 4294901760
    %v281 = vsub.f32 %v279, %v280
    %v282 = vand.u32 %v281, 4294901760
    %283 = vmatpush1.msra.mxu0 %v282
    %284 = vmatprep.subr.mxu0 0.0
    %v285 = vand.u32 %v56, 4294901760
    %v286 = vsub.f32 %v56, %v285
    %v287 = vand.u32 %v286, 4294901760
    %v288 = vsub.f32 %v286, %v287
    %v289 = vand.u32 %v288, 4294901760
    %290 = vmatpush1.msra.mxu0 %v289
    %291 = vmatprep.subr.mxu0 0.0
    %v292 = vand.u32 %v57, 4294901760
    %v293 = vsub.f32 %v57, %v292
    %v294 = vand.u32 %v293, 4294901760
    %v295 = vsub.f32 %v293, %v294
    %v296 = vand.u32 %v295, 4294901760
    %297 = vmatpush1.msra.mxu0 %v296
    %298 = vmatprep.subr.mxu0 0.0
    %v299 = vand.u32 %v58, 4294901760
    %v300 = vsub.f32 %v58, %v299
    %v301 = vand.u32 %v300, 4294901760
    %v302 = vsub.f32 %v300, %v301
    %v303 = vand.u32 %v302, 4294901760
    %304 = vmatpush1.msra.mxu0 %v303
    %305 = vmatprep.subr.mxu0 0.0
    %v306 = vand.u32 %v59, 4294901760
    %v307 = vsub.f32 %v59, %v306
    %v308 = vand.u32 %v307, 4294901760
    %v309 = vsub.f32 %v307, %v308
    %v310 = vand.u32 %v309, 4294901760
    %311 = vmatpush1.msra.mxu0 %v310
    %312 = vmatprep.subr.mxu0 0.0
    %v313 = vand.u32 %v60, 4294901760
    %v314 = vsub.f32 %v60, %v313
    %v315 = vand.u32 %v314, 4294901760
    %v316 = vsub.f32 %v314, %v315
    %v317 = vand.u32 %v316, 4294901760
    %318 = vmatpush1.msra.mxu0 %v317
    %319 = vmatprep.subr.mxu0 0.0
    %v320 = vand.u32 %v61, 4294901760
    %v321 = vsub.f32 %v61, %v320
    %v322 = vand.u32 %v321, 4294901760
    %v323 = vsub.f32 %v321, %v322
    %v324 = vand.u32 %v323, 4294901760
    %325 = vmatpush1.msra.mxu0 %v324
    %326 = vmatprep.subr.mxu0 0.0
    %v327 = vand.u32 %v62, 4294901760
    %v328 = vsub.f32 %v62, %v327
    %v329 = vand.u32 %v328, 4294901760
    %v330 = vsub.f32 %v328, %v329
    %v331 = vand.u32 %v330, 4294901760
    %332 = vmatpush1.msra.mxu0 %v331
    %333 = vmatprep.subr.mxu0 0.0
    %v334 = vand.u32 %v63, 4294901760
    %v335 = vsub.f32 %v63, %v334
    %v336 = vand.u32 %v335, 4294901760
    %v337 = vsub.f32 %v335, %v336
    %v338 = vand.u32 %v337, 4294901760
    %339 = vmatpush1.msra.mxu0 %v338
    %340 = vmatprep.subr.mxu0 0.0
    %v341 = vand.u32 %v64, 4294901760
    %v342 = vsub.f32 %v64, %v341
    %v343 = vand.u32 %v342, 4294901760
    %v344 = vsub.f32 %v342, %v343
    %v345 = vand.u32 %v344, 4294901760
    %346 = vmatpush1.msra.mxu0 %v345
    %347 = vmatprep.subr.mxu0 0.0
    %v348 = vand.u32 %v65, 4294901760
    %v349 = vsub.f32 %v65, %v348
    %v350 = vand.u32 %v349, 4294901760
    %v351 = vsub.f32 %v349, %v350
    %v352 = vand.u32 %v351, 4294901760
    %353 = vmatpush1.msra.mxu0 %v352
    %354 = vmatprep.subr.mxu0 0.0
    %v355 = vand.u32 %v66, 4294901760
    %v356 = vsub.f32 %v66, %v355
    %v357 = vand.u32 %v356, 4294901760
    %v358 = vsub.f32 %v356, %v357
    %v359 = vand.u32 %v358, 4294901760
    %360 = vmatpush1.msra.mxu0 %v359
    %361 = vmatprep.subr.mxu0 0.0
    %v362 = vand.u32 %v67, 4294901760
    %v363 = vsub.f32 %v67, %v362
    %v364 = vand.u32 %v363, 4294901760
    %v365 = vsub.f32 %v363, %v364
    %v366 = vand.u32 %v365, 4294901760
    %367 = vmatpush1.msra.mxu0 %v366
    %368 = vmatprep.subr.mxu0 0.0
    %v369 = vand.u32 %v68, 4294901760
    %v370 = vsub.f32 %v68, %v369
    %v371 = vand.u32 %v370, 4294901760
    %v372 = vsub.f32 %v370, %v371
    %v373 = vand.u32 %v372, 4294901760
    %374 = vmatpush1.msra.mxu0 %v373
    %375 = vmatprep.subr.mxu0 0.0
    %v376 = vand.u32 %v69, 4294901760
    %v377 = vsub.f32 %v69, %v376
    %v378 = vand.u32 %v377, 4294901760
    %v379 = vsub.f32 %v377, %v378
    %v380 = vand.u32 %v379, 4294901760
    %381 = vmatpush1.msra.mxu0 %v380
    %382 = vmatprep.subr.mxu0 0.0
    %v383 = vand.u32 %v70, 4294901760
    %v384 = vsub.f32 %v70, %v383
    %v385 = vand.u32 %v384, 4294901760
    %v386 = vsub.f32 %v384, %v385
    %v387 = vand.u32 %v386, 4294901760
    %388 = vmatpush1.msra.mxu0 %v387
    %389 = vmatprep.subr.mxu0 0.0
    %v390 = vand.u32 %v71, 4294901760
    %v391 = vsub.f32 %v71, %v390
    %v392 = vand.u32 %v391, 4294901760
    %v393 = vsub.f32 %v391, %v392
    %v394 = vand.u32 %v393, 4294901760
    %395 = vmatpush1.msra.mxu0 %v394
    %396 = vmatprep.subr.mxu0 0.0
    %v397 = vand.u32 %v72, 4294901760
    %v398 = vsub.f32 %v72, %v397
    %v399 = vand.u32 %v398, 4294901760
    %v400 = vsub.f32 %v398, %v399
    %v401 = vand.u32 %v400, 4294901760
    %402 = vmatpush1.msra.mxu0 %v401
    %403 = vmatprep.subr.mxu0 0.0
    %v404 = vand.u32 %v73, 4294901760
    %v405 = vsub.f32 %v73, %v404
    %v406 = vand.u32 %v405, 4294901760
    %v407 = vsub.f32 %v405, %v406
    %v408 = vand.u32 %v407, 4294901760
    %409 = vmatpush1.msra.mxu0 %v408
    %410 = vmatprep.subr.mxu0 0.0
    %v411 = vand.u32 %v74, 4294901760
    %v412 = vsub.f32 %v74, %v411
    %v413 = vand.u32 %v412, 4294901760
    %v414 = vsub.f32 %v412, %v413
    %v415 = vand.u32 %v414, 4294901760
    %416 = vmatpush1.msra.mxu0 %v415
    %417 = vmatprep.subr.mxu0 0.0
    %v418 = vand.u32 %v75, 4294901760
    %v419 = vsub.f32 %v75, %v418
    %v420 = vand.u32 %v419, 4294901760
    %v421 = vsub.f32 %v419, %v420
    %v422 = vand.u32 %v421, 4294901760
    %423 = vmatpush1.msra.mxu0 %v422
    %424 = vmatprep.subr.mxu0 0.0
    %v425 = vand.u32 %v76, 4294901760
    %v426 = vsub.f32 %v76, %v425
    %v427 = vand.u32 %v426, 4294901760
    %v428 = vsub.f32 %v426, %v427
    %v429 = vand.u32 %v428, 4294901760
    %430 = vmatpush1.msra.mxu0 %v429
    %v431 = vand.u32 %v43, 4294901760
    %432 = vmatprep.mubr.f32.mxu0 %v431
    %v433 = vand.u32 %v42, 4294901760
    %434 = vmatmul.mubr.f32.gmra.mrb[0].mxu0 %v433
    %v435 = vpop.f32.mrb[0].mxu0
    %v436 = vadd.f32 %v204, %v435
    %v437 = vpop.f32.mrb[0].mxu0
    %438 = vdwg.mxu0
    %439 = vmatprep.subr.mxu0 0.0
    %v440 = vand.u32 %v45, 4294901760
    %v441 = vsub.f32 %v45, %v440
    %442 = vmatpush1.msra.mxu0 %v441
    %443 = vmatprep.subr.mxu0 0.0
    %v444 = vand.u32 %v46, 4294901760
    %v445 = vsub.f32 %v46, %v444
    %446 = vmatpush1.msra.mxu0 %v445
    %447 = vmatprep.subr.mxu0 0.0
    %v448 = vand.u32 %v47, 4294901760
    %v449 = vsub.f32 %v47, %v448
    %450 = vmatpush1.msra.mxu0 %v449
    %451 = vmatprep.subr.mxu0 0.0
    %v452 = vand.u32 %v48, 4294901760
    %v453 = vsub.f32 %v48, %v452
    %454 = vmatpush1.msra.mxu0 %v453
    %455 = vmatprep.subr.mxu0 0.0
    %v456 = vand.u32 %v49, 4294901760
    %v457 = vsub.f32 %v49, %v456
    %458 = vmatpush1.msra.mxu0 %v457
    %459 = vmatprep.subr.mxu0 0.0
    %v460 = vand.u32 %v50, 4294901760
    %v461 = vsub.f32 %v50, %v460
    %462 = vmatpush1.msra.mxu0 %v461
    %463 = vmatprep.subr.mxu0 0.0
    %v464 = vand.u32 %v51, 4294901760
    %v465 = vsub.f32 %v51, %v464
    %466 = vmatpush1.msra.mxu0 %v465
    %467 = vmatprep.subr.mxu0 0.0
    %v468 = vand.u32 %v52, 4294901760
    %v469 = vsub.f32 %v52, %v468
    %470 = vmatpush1.msra.mxu0 %v469
    %471 = vmatprep.subr.mxu0 0.0
    %v472 = vand.u32 %v53, 4294901760
    %v473 = vsub.f32 %v53, %v472
    %474 = vmatpush1.msra.mxu0 %v473
    %475 = vmatprep.subr.mxu0 0.0
    %v476 = vand.u32 %v54, 4294901760
    %v477 = vsub.f32 %v54, %v476
    %478 = vmatpush1.msra.mxu0 %v477
    %479 = vmatprep.subr.mxu0 0.0
    %v480 = vand.u32 %v55, 4294901760
    %v481 = vsub.f32 %v55, %v480
    %482 = vmatpush1.msra.mxu0 %v481
    %483 = vmatprep.subr.mxu0 0.0
    %v484 = vand.u32 %v56, 4294901760
    %v485 = vsub.f32 %v56, %v484
    %486 = vmatpush1.msra.mxu0 %v485
    %487 = vmatprep.subr.mxu0 0.0
    %v488 = vand.u32 %v57, 4294901760
    %v489 = vsub.f32 %v57, %v488
    %490 = vmatpush1.msra.mxu0 %v489
    %491 = vmatprep.subr.mxu0 0.0
    %v492 = vand.u32 %v58, 4294901760
    %v493 = vsub.f32 %v58, %v492
    %494 = vmatpush1.msra.mxu0 %v493
    %495 = vmatprep.subr.mxu0 0.0
    %v496 = vand.u32 %v59, 4294901760
    %v497 = vsub.f32 %v59, %v496
    %498 = vmatpush1.msra.mxu0 %v497
    %499 = vmatprep.subr.mxu0 0.0
    %v500 = vand.u32 %v60, 4294901760
    %v501 = vsub.f32 %v60, %v500
    %502 = vmatpush1.msra.mxu0 %v501
    %503 = vmatprep.subr.mxu0 0.0
    %v504 = vand.u32 %v61, 4294901760
    %v505 = vsub.f32 %v61, %v504
    %506 = vmatpush1.msra.mxu0 %v505
    %507 = vmatprep.subr.mxu0 0.0
    %v508 = vand.u32 %v62, 4294901760
    %v509 = vsub.f32 %v62, %v508
    %510 = vmatpush1.msra.mxu0 %v509
    %511 = vmatprep.subr.mxu0 0.0
    %v512 = vand.u32 %v63, 4294901760
    %v513 = vsub.f32 %v63, %v512
    %514 = vmatpush1.msra.mxu0 %v513
    %515 = vmatprep.subr.mxu0 0.0
    %v516 = vand.u32 %v64, 4294901760
    %v517 = vsub.f32 %v64, %v516
    %518 = vmatpush1.msra.mxu0 %v517
    %519 = vmatprep.subr.mxu0 0.0
    %v520 = vand.u32 %v65, 4294901760
    %v521 = vsub.f32 %v65, %v520
    %522 = vmatpush1.msra.mxu0 %v521
    %523 = vmatprep.subr.mxu0 0.0
    %v524 = vand.u32 %v66, 4294901760
    %v525 = vsub.f32 %v66, %v524
    %526 = vmatpush1.msra.mxu0 %v525
    %527 = vmatprep.subr.mxu0 0.0
    %v528 = vand.u32 %v67, 4294901760
    %v529 = vsub.f32 %v67, %v528
    %530 = vmatpush1.msra.mxu0 %v529
    %531 = vmatprep.subr.mxu0 0.0
    %v532 = vand.u32 %v68, 4294901760
    %v533 = vsub.f32 %v68, %v532
    %534 = vmatpush1.msra.mxu0 %v533
    %535 = vmatprep.subr.mxu0 0.0
    %v536 = vand.u32 %v69, 4294901760
    %v537 = vsub.f32 %v69, %v536
    %538 = vmatpush1.msra.mxu0 %v537
    %539 = vmatprep.subr.mxu0 0.0
    %v540 = vand.u32 %v70, 4294901760
    %v541 = vsub.f32 %v70, %v540
    %542 = vmatpush1.msra.mxu0 %v541
    %543 = vmatprep.subr.mxu0 0.0
    %v544 = vand.u32 %v71, 4294901760
    %v545 = vsub.f32 %v71, %v544
    %546 = vmatpush1.msra.mxu0 %v545
    %547 = vmatprep.subr.mxu0 0.0
    %v548 = vand.u32 %v72, 4294901760
    %v549 = vsub.f32 %v72, %v548
    %550 = vmatpush1.msra.mxu0 %v549
    %551 = vmatprep.subr.mxu0 0.0
    %v552 = vand.u32 %v73, 4294901760
    %v553 = vsub.f32 %v73, %v552
    %554 = vmatpush1.msra.mxu0 %v553
    %555 = vmatprep.subr.mxu0 0.0
    %v556 = vand.u32 %v74, 4294901760
    %v557 = vsub.f32 %v74, %v556
    %558 = vmatpush1.msra.mxu0 %v557
    %559 = vmatprep.subr.mxu0 0.0
    %v560 = vand.u32 %v75, 4294901760
    %v561 = vsub.f32 %v75, %v560
    %562 = vmatpush1.msra.mxu0 %v561
    %563 = vmatprep.subr.mxu0 0.0
    %v564 = vand.u32 %v76, 4294901760
    %v565 = vsub.f32 %v76, %v564
    %566 = vmatpush1.msra.mxu0 %v565
    %v567 = vand.u32 %v43, 4294901760
    %v568 = vsub.f32 %v43, %v567
    %569 = vmatprep.mubr.f32.mxu0 %v568
    %v570 = vand.u32 %v42, 4294901760
    %v571 = vsub.f32 %v42, %v570
    %572 = vmatmul.mubr.f32.gmra.mrb[0].mxu0 %v571
    %v573 = vpop.f32.mrb[0].mxu0
    %v574 = vadd.f32 %v436, %v573
    %v575 = vpop.f32.mrb[0].mxu0
    %576 = vdwg.mxu0
    %577 = vmatprep.subr.mxu0 0.0
    %v578 = vand.u32 %v45, 4294901760
    %579 = vmatpush1.msra.mxu0 %v578
    %580 = vmatprep.subr.mxu0 0.0
    %v581 = vand.u32 %v46, 4294901760
    %582 = vmatpush1.msra.mxu0 %v581
    %583 = vmatprep.subr.mxu0 0.0
    %v584 = vand.u32 %v47, 4294901760
    %585 = vmatpush1.msra.mxu0 %v584
    %586 = vmatprep.subr.mxu0 0.0
    %v587 = vand.u32 %v48, 4294901760
    %588 = vmatpush1.msra.mxu0 %v587
    %589 = vmatprep.subr.mxu0 0.0
    %v590 = vand.u32 %v49, 4294901760
    %591 = vmatpush1.msra.mxu0 %v590
    %592 = vmatprep.subr.mxu0 0.0
    %v593 = vand.u32 %v50, 4294901760
    %594 = vmatpush1.msra.mxu0 %v593
    %595 = vmatprep.subr.mxu0 0.0
    %v596 = vand.u32 %v51, 4294901760
    %597 = vmatpush1.msra.mxu0 %v596
    %598 = vmatprep.subr.mxu0 0.0
    %v599 = vand.u32 %v52, 4294901760
    %600 = vmatpush1.msra.mxu0 %v599
    %601 = vmatprep.subr.mxu0 0.0
    %v602 = vand.u32 %v53, 4294901760
    %603 = vmatpush1.msra.mxu0 %v602
    %604 = vmatprep.subr.mxu0 0.0
    %v605 = vand.u32 %v54, 4294901760
    %606 = vmatpush1.msra.mxu0 %v605
    %607 = vmatprep.subr.mxu0 0.0
    %v608 = vand.u32 %v55, 4294901760
    %609 = vmatpush1.msra.mxu0 %v608
    %610 = vmatprep.subr.mxu0 0.0
    %v611 = vand.u32 %v56, 4294901760
    %612 = vmatpush1.msra.mxu0 %v611
    %613 = vmatprep.subr.mxu0 0.0
    %v614 = vand.u32 %v57, 4294901760
    %615 = vmatpush1.msra.mxu0 %v614
    %616 = vmatprep.subr.mxu0 0.0
    %v617 = vand.u32 %v58, 4294901760
    %618 = vmatpush1.msra.mxu0 %v617
    %619 = vmatprep.subr.mxu0 0.0
    %v620 = vand.u32 %v59, 4294901760
    %621 = vmatpush1.msra.mxu0 %v620
    %622 = vmatprep.subr.mxu0 0.0
    %v623 = vand.u32 %v60, 4294901760
    %624 = vmatpush1.msra.mxu0 %v623
    %625 = vmatprep.subr.mxu0 0.0
    %v626 = vand.u32 %v61, 4294901760
    %627 = vmatpush1.msra.mxu0 %v626
    %628 = vmatprep.subr.mxu0 0.0
    %v629 = vand.u32 %v62, 4294901760
    %630 = vmatpush1.msra.mxu0 %v629
    %631 = vmatprep.subr.mxu0 0.0
    %v632 = vand.u32 %v63, 4294901760
    %633 = vmatpush1.msra.mxu0 %v632
    %634 = vmatprep.subr.mxu0 0.0
    %v635 = vand.u32 %v64, 4294901760
    %636 = vmatpush1.msra.mxu0 %v635
    %637 = vmatprep.subr.mxu0 0.0
    %v638 = vand.u32 %v65, 4294901760
    %639 = vmatpush1.msra.mxu0 %v638
    %640 = vmatprep.subr.mxu0 0.0
    %v641 = vand.u32 %v66, 4294901760
    %642 = vmatpush1.msra.mxu0 %v641
    %643 = vmatprep.subr.mxu0 0.0
    %v644 = vand.u32 %v67, 4294901760
    %645 = vmatpush1.msra.mxu0 %v644
    %646 = vmatprep.subr.mxu0 0.0
    %v647 = vand.u32 %v68, 4294901760
    %648 = vmatpush1.msra.mxu0 %v647
    %649 = vmatprep.subr.mxu0 0.0
    %v650 = vand.u32 %v69, 4294901760
    %651 = vmatpush1.msra.mxu0 %v650
    %652 = vmatprep.subr.mxu0 0.0
    %v653 = vand.u32 %v70, 4294901760
    %654 = vmatpush1.msra.mxu0 %v653
    %655 = vmatprep.subr.mxu0 0.0
    %v656 = vand.u32 %v71, 4294901760
    %657 = vmatpush1.msra.mxu0 %v656
    %658 = vmatprep.subr.mxu0 0.0
    %v659 = vand.u32 %v72, 4294901760
    %660 = vmatpush1.msra.mxu0 %v659
    %661 = vmatprep.subr.mxu0 0.0
    %v662 = vand.u32 %v73, 4294901760
    %663 = vmatpush1.msra.mxu0 %v662
    %664 = vmatprep.subr.mxu0 0.0
    %v665 = vand.u32 %v74, 4294901760
    %666 = vmatpush1.msra.mxu0 %v665
    %667 = vmatprep.subr.mxu0 0.0
    %v668 = vand.u32 %v75, 4294901760
    %669 = vmatpush1.msra.mxu0 %v668
    %670 = vmatprep.subr.mxu0 0.0
    %v671 = vand.u32 %v76, 4294901760
    %672 = vmatpush1.msra.mxu0 %v671
    %v673 = vand.u32 %v43, 4294901760
    %v674 = vsub.f32 %v43, %v673
    %v675 = vand.u32 %v674, 4294901760
    %676 = vmatprep.mubr.f32.mxu0 %v675
    %v677 = vand.u32 %v42, 4294901760
    %v678 = vsub.f32 %v42, %v677
    %v679 = vand.u32 %v678, 4294901760
    %680 = vmatmul.mubr.f32.gmra.mrb[0].mxu0 %v679
    %v681 = vpop.f32.mrb[0].mxu0
    %v682 = vadd.f32 %v574, %v681
    %v683 = vpop.f32.mrb[0].mxu0
    %684 = vdwg.mxu0
    %685 = vmatprep.subr.mxu0 0.0
    %v686 = vand.u32 %v45, 4294901760
    %v687 = vsub.f32 %v45, %v686
    %v688 = vand.u32 %v687, 4294901760
    %689 = vmatpush1.msra.mxu0 %v688
    %690 = vmatprep.subr.mxu0 0.0
    %v691 = vand.u32 %v46, 4294901760
    %v692 = vsub.f32 %v46, %v691
    %v693 = vand.u32 %v692, 4294901760
    %694 = vmatpush1.msra.mxu0 %v693
    %695 = vmatprep.subr.mxu0 0.0
    %v696 = vand.u32 %v47, 4294901760
    %v697 = vsub.f32 %v47, %v696
    %v698 = vand.u32 %v697, 4294901760
    %699 = vmatpush1.msra.mxu0 %v698
    %700 = vmatprep.subr.mxu0 0.0
    %v701 = vand.u32 %v48, 4294901760
    %v702 = vsub.f32 %v48, %v701
    %v703 = vand.u32 %v702, 4294901760
    %704 = vmatpush1.msra.mxu0 %v703
    %705 = vmatprep.subr.mxu0 0.0
    %v706 = vand.u32 %v49, 4294901760
    %v707 = vsub.f32 %v49, %v706
    %v708 = vand.u32 %v707, 4294901760
    %709 = vmatpush1.msra.mxu0 %v708
    %710 = vmatprep.subr.mxu0 0.0
    %v711 = vand.u32 %v50, 4294901760
    %v712 = vsub.f32 %v50, %v711
    %v713 = vand.u32 %v712, 4294901760
    %714 = vmatpush1.msra.mxu0 %v713
    %715 = vmatprep.subr.mxu0 0.0
    %v716 = vand.u32 %v51, 4294901760
    %v717 = vsub.f32 %v51, %v716
    %v718 = vand.u32 %v717, 4294901760
    %719 = vmatpush1.msra.mxu0 %v718
    %720 = vmatprep.subr.mxu0 0.0
    %v721 = vand.u32 %v52, 4294901760
    %v722 = vsub.f32 %v52, %v721
    %v723 = vand.u32 %v722, 4294901760
    %724 = vmatpush1.msra.mxu0 %v723
    %725 = vmatprep.subr.mxu0 0.0
    %v726 = vand.u32 %v53, 4294901760
    %v727 = vsub.f32 %v53, %v726
    %v728 = vand.u32 %v727, 4294901760
    %729 = vmatpush1.msra.mxu0 %v728
    %730 = vmatprep.subr.mxu0 0.0
    %v731 = vand.u32 %v54, 4294901760
    %v732 = vsub.f32 %v54, %v731
    %v733 = vand.u32 %v732, 4294901760
    %734 = vmatpush1.msra.mxu0 %v733
    %735 = vmatprep.subr.mxu0 0.0
    %v736 = vand.u32 %v55, 4294901760
    %v737 = vsub.f32 %v55, %v736
    %v738 = vand.u32 %v737, 4294901760
    %739 = vmatpush1.msra.mxu0 %v738
    %740 = vmatprep.subr.mxu0 0.0
    %v741 = vand.u32 %v56, 4294901760
    %v742 = vsub.f32 %v56, %v741
    %v743 = vand.u32 %v742, 4294901760
    %744 = vmatpush1.msra.mxu0 %v743
    %745 = vmatprep.subr.mxu0 0.0
    %v746 = vand.u32 %v57, 4294901760
    %v747 = vsub.f32 %v57, %v746
    %v748 = vand.u32 %v747, 4294901760
    %749 = vmatpush1.msra.mxu0 %v748
    %750 = vmatprep.subr.mxu0 0.0
    %v751 = vand.u32 %v58, 4294901760
    %v752 = vsub.f32 %v58, %v751
    %v753 = vand.u32 %v752, 4294901760
    %754 = vmatpush1.msra.mxu0 %v753
    %755 = vmatprep.subr.mxu0 0.0
    %v756 = vand.u32 %v59, 4294901760
    %v757 = vsub.f32 %v59, %v756
    %v758 = vand.u32 %v757, 4294901760
    %759 = vmatpush1.msra.mxu0 %v758
    %760 = vmatprep.subr.mxu0 0.0
    %v761 = vand.u32 %v60, 4294901760
    %v762 = vsub.f32 %v60, %v761
    %v763 = vand.u32 %v762, 4294901760
    %764 = vmatpush1.msra.mxu0 %v763
    %765 = vmatprep.subr.mxu0 0.0
    %v766 = vand.u32 %v61, 4294901760
    %v767 = vsub.f32 %v61, %v766
    %v768 = vand.u32 %v767, 4294901760
    %769 = vmatpush1.msra.mxu0 %v768
    %770 = vmatprep.subr.mxu0 0.0
    %v771 = vand.u32 %v62, 4294901760
    %v772 = vsub.f32 %v62, %v771
    %v773 = vand.u32 %v772, 4294901760
    %774 = vmatpush1.msra.mxu0 %v773
    %775 = vmatprep.subr.mxu0 0.0
    %v776 = vand.u32 %v63, 4294901760
    %v777 = vsub.f32 %v63, %v776
    %v778 = vand.u32 %v777, 4294901760
    %779 = vmatpush1.msra.mxu0 %v778
    %780 = vmatprep.subr.mxu0 0.0
    %v781 = vand.u32 %v64, 4294901760
    %v782 = vsub.f32 %v64, %v781
    %v783 = vand.u32 %v782, 4294901760
    %784 = vmatpush1.msra.mxu0 %v783
    %785 = vmatprep.subr.mxu0 0.0
    %v786 = vand.u32 %v65, 4294901760
    %v787 = vsub.f32 %v65, %v786
    %v788 = vand.u32 %v787, 4294901760
    %789 = vmatpush1.msra.mxu0 %v788
    %790 = vmatprep.subr.mxu0 0.0
    %v791 = vand.u32 %v66, 4294901760
    %v792 = vsub.f32 %v66, %v791
    %v793 = vand.u32 %v792, 4294901760
    %794 = vmatpush1.msra.mxu0 %v793
    %795 = vmatprep.subr.mxu0 0.0
    %v796 = vand.u32 %v67, 4294901760
    %v797 = vsub.f32 %v67, %v796
    %v798 = vand.u32 %v797, 4294901760
    %799 = vmatpush1.msra.mxu0 %v798
    %800 = vmatprep.subr.mxu0 0.0
    %v801 = vand.u32 %v68, 4294901760
    %v802 = vsub.f32 %v68, %v801
    %v803 = vand.u32 %v802, 4294901760
    %804 = vmatpush1.msra.mxu0 %v803
    %805 = vmatprep.subr.mxu0 0.0
    %v806 = vand.u32 %v69, 4294901760
    %v807 = vsub.f32 %v69, %v806
    %v808 = vand.u32 %v807, 4294901760
    %809 = vmatpush1.msra.mxu0 %v808
    %810 = vmatprep.subr.mxu0 0.0
    %v811 = vand.u32 %v70, 4294901760
    %v812 = vsub.f32 %v70, %v811
    %v813 = vand.u32 %v812, 4294901760
    %814 = vmatpush1.msra.mxu0 %v813
    %815 = vmatprep.subr.mxu0 0.0
    %v816 = vand.u32 %v71, 4294901760
    %v817 = vsub.f32 %v71, %v816
    %v818 = vand.u32 %v817, 4294901760
    %819 = vmatpush1.msra.mxu0 %v818
    %820 = vmatprep.subr.mxu0 0.0
    %v821 = vand.u32 %v72, 4294901760
    %v822 = vsub.f32 %v72, %v821
    %v823 = vand.u32 %v822, 4294901760
    %824 = vmatpush1.msra.mxu0 %v823
    %825 = vmatprep.subr.mxu0 0.0
    %v826 = vand.u32 %v73, 4294901760
    %v827 = vsub.f32 %v73, %v826
    %v828 = vand.u32 %v827, 4294901760
    %829 = vmatpush1.msra.mxu0 %v828
    %830 = vmatprep.subr.mxu0 0.0
    %v831 = vand.u32 %v74, 4294901760
    %v832 = vsub.f32 %v74, %v831
    %v833 = vand.u32 %v832, 4294901760
    %834 = vmatpush1.msra.mxu0 %v833
    %835 = vmatprep.subr.mxu0 0.0
    %v836 = vand.u32 %v75, 4294901760
    %v837 = vsub.f32 %v75, %v836
    %v838 = vand.u32 %v837, 4294901760
    %839 = vmatpush1.msra.mxu0 %v838
    %840 = vmatprep.subr.mxu0 0.0
    %v841 = vand.u32 %v76, 4294901760
    %v842 = vsub.f32 %v76, %v841
    %v843 = vand.u32 %v842, 4294901760
    %844 = vmatpush1.msra.mxu0 %v843
    %v845 = vand.u32 %v43, 4294901760
    %846 = vmatprep.mubr.f32.mxu0 %v845
    %v847 = vand.u32 %v42, 4294901760
    %848 = vmatmul.mubr.f32.gmra.mrb[0].mxu0 %v847
    %v849 = vpop.f32.mrb[0].mxu0
    %v850 = vadd.f32 %v682, %v849
    %v851 = vpop.f32.mrb[0].mxu0
    %852 = vdwg.mxu0
    %853 = vmatprep.subr.mxu0 0.0
    %v854 = vand.u32 %v45, 4294901760
    %855 = vmatpush1.msra.mxu0 %v854
    %856 = vmatprep.subr.mxu0 0.0
    %v857 = vand.u32 %v46, 4294901760
    %858 = vmatpush1.msra.mxu0 %v857
    %859 = vmatprep.subr.mxu0 0.0
    %v860 = vand.u32 %v47, 4294901760
    %861 = vmatpush1.msra.mxu0 %v860
    %862 = vmatprep.subr.mxu0 0.0
    %v863 = vand.u32 %v48, 4294901760
    %864 = vmatpush1.msra.mxu0 %v863
    %865 = vmatprep.subr.mxu0 0.0
    %v866 = vand.u32 %v49, 4294901760
    %867 = vmatpush1.msra.mxu0 %v866
    %868 = vmatprep.subr.mxu0 0.0
    %v869 = vand.u32 %v50, 4294901760
    %870 = vmatpush1.msra.mxu0 %v869
    %871 = vmatprep.subr.mxu0 0.0
    %v872 = vand.u32 %v51, 4294901760
    %873 = vmatpush1.msra.mxu0 %v872
    %874 = vmatprep.subr.mxu0 0.0
    %v875 = vand.u32 %v52, 4294901760
    %876 = vmatpush1.msra.mxu0 %v875
    %877 = vmatprep.subr.mxu0 0.0
    %v878 = vand.u32 %v53, 4294901760
    %879 = vmatpush1.msra.mxu0 %v878
    %880 = vmatprep.subr.mxu0 0.0
    %v881 = vand.u32 %v54, 4294901760
    %882 = vmatpush1.msra.mxu0 %v881
    %883 = vmatprep.subr.mxu0 0.0
    %v884 = vand.u32 %v55, 4294901760
    %885 = vmatpush1.msra.mxu0 %v884
    %886 = vmatprep.subr.mxu0 0.0
    %v887 = vand.u32 %v56, 4294901760
    %888 = vmatpush1.msra.mxu0 %v887
    %889 = vmatprep.subr.mxu0 0.0
    %v890 = vand.u32 %v57, 4294901760
    %891 = vmatpush1.msra.mxu0 %v890
    %892 = vmatprep.subr.mxu0 0.0
    %v893 = vand.u32 %v58, 4294901760
    %894 = vmatpush1.msra.mxu0 %v893
    %895 = vmatprep.subr.mxu0 0.0
    %v896 = vand.u32 %v59, 4294901760
    %897 = vmatpush1.msra.mxu0 %v896
    %898 = vmatprep.subr.mxu0 0.0
    %v899 = vand.u32 %v60, 4294901760
    %900 = vmatpush1.msra.mxu0 %v899
    %901 = vmatprep.subr.mxu0 0.0
    %v902 = vand.u32 %v61, 4294901760
    %903 = vmatpush1.msra.mxu0 %v902
    %904 = vmatprep.subr.mxu0 0.0
    %v905 = vand.u32 %v62, 4294901760
    %906 = vmatpush1.msra.mxu0 %v905
    %907 = vmatprep.subr.mxu0 0.0
    %v908 = vand.u32 %v63, 4294901760
    %909 = vmatpush1.msra.mxu0 %v908
    %910 = vmatprep.subr.mxu0 0.0
    %v911 = vand.u32 %v64, 4294901760
    %912 = vmatpush1.msra.mxu0 %v911
    %913 = vmatprep.subr.mxu0 0.0
    %v914 = vand.u32 %v65, 4294901760
    %915 = vmatpush1.msra.mxu0 %v914
    %916 = vmatprep.subr.mxu0 0.0
    %v917 = vand.u32 %v66, 4294901760
    %918 = vmatpush1.msra.mxu0 %v917
    %919 = vmatprep.subr.mxu0 0.0
    %v920 = vand.u32 %v67, 4294901760
    %921 = vmatpush1.msra.mxu0 %v920
    %922 = vmatprep.subr.mxu0 0.0
    %v923 = vand.u32 %v68, 4294901760
    %924 = vmatpush1.msra.mxu0 %v923
    %925 = vmatprep.subr.mxu0 0.0
    %v926 = vand.u32 %v69, 4294901760
    %927 = vmatpush1.msra.mxu0 %v926
    %928 = vmatprep.subr.mxu0 0.0
    %v929 = vand.u32 %v70, 4294901760
    %930 = vmatpush1.msra.mxu0 %v929
    %931 = vmatprep.subr.mxu0 0.0
    %v932 = vand.u32 %v71, 4294901760
    %933 = vmatpush1.msra.mxu0 %v932
    %934 = vmatprep.subr.mxu0 0.0
    %v935 = vand.u32 %v72, 4294901760
    %936 = vmatpush1.msra.mxu0 %v935
    %937 = vmatprep.subr.mxu0 0.0
    %v938 = vand.u32 %v73, 4294901760
    %939 = vmatpush1.msra.mxu0 %v938
    %940 = vmatprep.subr.mxu0 0.0
    %v941 = vand.u32 %v74, 4294901760
    %942 = vmatpush1.msra.mxu0 %v941
    %943 = vmatprep.subr.mxu0 0.0
    %v944 = vand.u32 %v75, 4294901760
    %945 = vmatpush1.msra.mxu0 %v944
    %946 = vmatprep.subr.mxu0 0.0
    %v947 = vand.u32 %v76, 4294901760
    %948 = vmatpush1.msra.mxu0 %v947
    %v949 = vand.u32 %v43, 4294901760
    %950 = vmatprep.mubr.f32.mxu0 %v949
    %v951 = vand.u32 %v42, 4294901760
    %952 = vmatmul.mubr.f32.gmra.mrb[0].mxu0 %v951
    %v953 = vpop.f32.mrb[0].mxu0
    %v954 = vadd.f32 %v850, %v953
    %v955 = vpop.f32.mrb[0].mxu0
    %956 = vdwg.mxu0
    %957 = vmatprep.subr.mxu0 0.0
    %v958 = vand.u32 %v77, 4294901760
    %959 = vmatpush1.msra.mxu0 %v958
    %960 = vmatprep.subr.mxu0 0.0
    %v961 = vand.u32 %v78, 4294901760
    %962 = vmatpush1.msra.mxu0 %v961
    %963 = vmatprep.subr.mxu0 0.0
    %v964 = vand.u32 %v79, 4294901760
    %965 = vmatpush1.msra.mxu0 %v964
    %966 = vmatprep.subr.mxu0 0.0
    %v967 = vand.u32 %v80, 4294901760
    %968 = vmatpush1.msra.mxu0 %v967
    %969 = vmatprep.subr.mxu0 0.0
    %v970 = vand.u32 %v81, 4294901760
    %971 = vmatpush1.msra.mxu0 %v970
    %972 = vmatprep.subr.mxu0 0.0
    %v973 = vand.u32 %v82, 4294901760
    %974 = vmatpush1.msra.mxu0 %v973
    %975 = vmatprep.subr.mxu0 0.0
    %v976 = vand.u32 %v83, 4294901760
    %977 = vmatpush1.msra.mxu0 %v976
    %978 = vmatprep.subr.mxu0 0.0
    %v979 = vand.u32 %v84, 4294901760
    %980 = vmatpush1.msra.mxu0 %v979
    %981 = vmatprep.subr.mxu0 0.0
    %v982 = vand.u32 %v85, 4294901760
    %983 = vmatpush1.msra.mxu0 %v982
    %984 = vmatprep.subr.mxu0 0.0
    %v985 = vand.u32 %v86, 4294901760
    %986 = vmatpush1.msra.mxu0 %v985
    %987 = vmatprep.subr.mxu0 0.0
    %v988 = vand.u32 %v87, 4294901760
    %989 = vmatpush1.msra.mxu0 %v988
    %990 = vmatprep.subr.mxu0 0.0
    %v991 = vand.u32 %v88, 4294901760
    %992 = vmatpush1.msra.mxu0 %v991
    %993 = vmatprep.subr.mxu0 0.0
    %v994 = vand.u32 %v89, 4294901760
    %995 = vmatpush1.msra.mxu0 %v994
    %996 = vmatprep.subr.mxu0 0.0
    %v997 = vand.u32 %v90, 4294901760
    %998 = vmatpush1.msra.mxu0 %v997
    %999 = vmatprep.subr.mxu0 0.0
    %v1000 = vand.u32 %v91, 4294901760
    %1001 = vmatpush1.msra.mxu0 %v1000
    %1002 = vmatprep.subr.mxu0 0.0
    %v1003 = vand.u32 %v92, 4294901760
    %1004 = vmatpush1.msra.mxu0 %v1003
    %1005 = vmatprep.subr.mxu0 0.0
    %1006 = vmatpush1.msra.mxu0 0.0
    %1007 = vmatprep.subr.mxu0 0.0
    %1008 = vmatpush1.msra.mxu0 0.0
    %1009 = vmatprep.subr.mxu0 0.0
    %1010 = vmatpush1.msra.mxu0 0.0
    %1011 = vmatprep.subr.mxu0 0.0
    %1012 = vmatpush1.msra.mxu0 0.0
    %1013 = vmatprep.subr.mxu0 0.0
    %1014 = vmatpush1.msra.mxu0 0.0
    %1015 = vmatprep.subr.mxu0 0.0
    %1016 = vmatpush1.msra.mxu0 0.0
    %1017 = vmatprep.subr.mxu0 0.0
    %1018 = vmatpush1.msra.mxu0 0.0
    %1019 = vmatprep.subr.mxu0 0.0
    %1020 = vmatpush1.msra.mxu0 0.0
    %1021 = vmatprep.subr.mxu0 0.0
    %1022 = vmatpush1.msra.mxu0 0.0
    %1023 = vmatprep.subr.mxu0 0.0
    %1024 = vmatpush1.msra.mxu0 0.0
    %1025 = vmatprep.subr.mxu0 0.0
    %1026 = vmatpush1.msra.mxu0 0.0
    %1027 = vmatprep.subr.mxu0 0.0
    %1028 = vmatpush1.msra.mxu0 0.0
    %1029 = vmatprep.subr.mxu0 0.0
    %1030 = vmatpush1.msra.mxu0 0.0
    %1031 = vmatprep.subr.mxu0 0.0
    %1032 = vmatpush1.msra.mxu0 0.0
    %1033 = vmatprep.subr.mxu0 0.0
    %1034 = vmatpush1.msra.mxu0 0.0
    %1035 = vmatprep.subr.mxu0 0.0
    %1036 = vmatpush1.msra.mxu0 0.0
    %1037 = vmatprep.mubr.f32.mxu0 0.0
    %v1038 = vand.u32 %v44, 4294901760
    %v1039 = vsub.f32 %v44, %v1038
    %v1040 = vand.u32 %v1039, 4294901760
    %v1041 = vsub.f32 %v1039, %v1040
    %v1042 = vand.u32 %v1041, 4294901760
    %1043 = vmatmul.mubr.f32.gmra.mrb[0].mxu0 %v1042
    %v1044 = vpop.f32.mrb[0].mxu0
    %v1045 = vadd.f32 %v954, %v1044
    %v1046 = vpop.f32.mrb[0].mxu0
    %1047 = vdwg.mxu0
    %1048 = vmatprep.subr.mxu0 0.0
    %v1049 = vand.u32 %v77, 4294901760
    %v1050 = vsub.f32 %v77, %v1049
    %v1051 = vand.u32 %v1050, 4294901760
    %v1052 = vsub.f32 %v1050, %v1051
    %v1053 = vand.u32 %v1052, 4294901760
    %1054 = vmatpush1.msra.mxu0 %v1053
    %1055 = vmatprep.subr.mxu0 0.0
    %v1056 = vand.u32 %v78, 4294901760
    %v1057 = vsub.f32 %v78, %v1056
    %v1058 = vand.u32 %v1057, 4294901760
    %v1059 = vsub.f32 %v1057, %v1058
    %v1060 = vand.u32 %v1059, 4294901760
    %1061 = vmatpush1.msra.mxu0 %v1060
    %1062 = vmatprep.subr.mxu0 0.0
    %v1063 = vand.u32 %v79, 4294901760
    %v1064 = vsub.f32 %v79, %v1063
    %v1065 = vand.u32 %v1064, 4294901760
    %v1066 = vsub.f32 %v1064, %v1065
    %v1067 = vand.u32 %v1066, 4294901760
    %1068 = vmatpush1.msra.mxu0 %v1067
    %1069 = vmatprep.subr.mxu0 0.0
    %v1070 = vand.u32 %v80, 4294901760
    %v1071 = vsub.f32 %v80, %v1070
    %v1072 = vand.u32 %v1071, 4294901760
    %v1073 = vsub.f32 %v1071, %v1072
    %v1074 = vand.u32 %v1073, 4294901760
    %1075 = vmatpush1.msra.mxu0 %v1074
    %1076 = vmatprep.subr.mxu0 0.0
    %v1077 = vand.u32 %v81, 4294901760
    %v1078 = vsub.f32 %v81, %v1077
    %v1079 = vand.u32 %v1078, 4294901760
    %v1080 = vsub.f32 %v1078, %v1079
    %v1081 = vand.u32 %v1080, 4294901760
    %1082 = vmatpush1.msra.mxu0 %v1081
    %1083 = vmatprep.subr.mxu0 0.0
    %v1084 = vand.u32 %v82, 4294901760
    %v1085 = vsub.f32 %v82, %v1084
    %v1086 = vand.u32 %v1085, 4294901760
    %v1087 = vsub.f32 %v1085, %v1086
    %v1088 = vand.u32 %v1087, 4294901760
    %1089 = vmatpush1.msra.mxu0 %v1088
    %1090 = vmatprep.subr.mxu0 0.0
    %v1091 = vand.u32 %v83, 4294901760
    %v1092 = vsub.f32 %v83, %v1091
    %v1093 = vand.u32 %v1092, 4294901760
    %v1094 = vsub.f32 %v1092, %v1093
    %v1095 = vand.u32 %v1094, 4294901760
    %1096 = vmatpush1.msra.mxu0 %v1095
    %1097 = vmatprep.subr.mxu0 0.0
    %v1098 = vand.u32 %v84, 4294901760
    %v1099 = vsub.f32 %v84, %v1098
    %v1100 = vand.u32 %v1099, 4294901760
    %v1101 = vsub.f32 %v1099, %v1100
    %v1102 = vand.u32 %v1101, 4294901760
    %1103 = vmatpush1.msra.mxu0 %v1102
    %1104 = vmatprep.subr.mxu0 0.0
    %v1105 = vand.u32 %v85, 4294901760
    %v1106 = vsub.f32 %v85, %v1105
    %v1107 = vand.u32 %v1106, 4294901760
    %v1108 = vsub.f32 %v1106, %v1107
    %v1109 = vand.u32 %v1108, 4294901760
    %1110 = vmatpush1.msra.mxu0 %v1109
    %1111 = vmatprep.subr.mxu0 0.0
    %v1112 = vand.u32 %v86, 4294901760
    %v1113 = vsub.f32 %v86, %v1112
    %v1114 = vand.u32 %v1113, 4294901760
    %v1115 = vsub.f32 %v1113, %v1114
    %v1116 = vand.u32 %v1115, 4294901760
    %1117 = vmatpush1.msra.mxu0 %v1116
    %1118 = vmatprep.subr.mxu0 0.0
    %v1119 = vand.u32 %v87, 4294901760
    %v1120 = vsub.f32 %v87, %v1119
    %v1121 = vand.u32 %v1120, 4294901760
    %v1122 = vsub.f32 %v1120, %v1121
    %v1123 = vand.u32 %v1122, 4294901760
    %1124 = vmatpush1.msra.mxu0 %v1123
    %1125 = vmatprep.subr.mxu0 0.0
    %v1126 = vand.u32 %v88, 4294901760
    %v1127 = vsub.f32 %v88, %v1126
    %v1128 = vand.u32 %v1127, 4294901760
    %v1129 = vsub.f32 %v1127, %v1128
    %v1130 = vand.u32 %v1129, 4294901760
    %1131 = vmatpush1.msra.mxu0 %v1130
    %1132 = vmatprep.subr.mxu0 0.0
    %v1133 = vand.u32 %v89, 4294901760
    %v1134 = vsub.f32 %v89, %v1133
    %v1135 = vand.u32 %v1134, 4294901760
    %v1136 = vsub.f32 %v1134, %v1135
    %v1137 = vand.u32 %v1136, 4294901760
    %1138 = vmatpush1.msra.mxu0 %v1137
    %1139 = vmatprep.subr.mxu0 0.0
    %v1140 = vand.u32 %v90, 4294901760
    %v1141 = vsub.f32 %v90, %v1140
    %v1142 = vand.u32 %v1141, 4294901760
    %v1143 = vsub.f32 %v1141, %v1142
    %v1144 = vand.u32 %v1143, 4294901760
    %1145 = vmatpush1.msra.mxu0 %v1144
    %1146 = vmatprep.subr.mxu0 0.0
    %v1147 = vand.u32 %v91, 4294901760
    %v1148 = vsub.f32 %v91, %v1147
    %v1149 = vand.u32 %v1148, 4294901760
    %v1150 = vsub.f32 %v1148, %v1149
    %v1151 = vand.u32 %v1150, 4294901760
    %1152 = vmatpush1.msra.mxu0 %v1151
    %1153 = vmatprep.subr.mxu0 0.0
    %v1154 = vand.u32 %v92, 4294901760
    %v1155 = vsub.f32 %v92, %v1154
    %v1156 = vand.u32 %v1155, 4294901760
    %v1157 = vsub.f32 %v1155, %v1156
    %v1158 = vand.u32 %v1157, 4294901760
    %1159 = vmatpush1.msra.mxu0 %v1158
    %1160 = vmatprep.subr.mxu0 0.0
    %1161 = vmatpush1.msra.mxu0 0.0
    %1162 = vmatprep.subr.mxu0 0.0
    %1163 = vmatpush1.msra.mxu0 0.0
    %1164 = vmatprep.subr.mxu0 0.0
    %1165 = vmatpush1.msra.mxu0 0.0
    %1166 = vmatprep.subr.mxu0 0.0
    %1167 = vmatpush1.msra.mxu0 0.0
    %1168 = vmatprep.subr.mxu0 0.0
    %1169 = vmatpush1.msra.mxu0 0.0
    %1170 = vmatprep.subr.mxu0 0.0
    %1171 = vmatpush1.msra.mxu0 0.0
    %1172 = vmatprep.subr.mxu0 0.0
    %1173 = vmatpush1.msra.mxu0 0.0
    %1174 = vmatprep.subr.mxu0 0.0
    %1175 = vmatpush1.msra.mxu0 0.0
    %1176 = vmatprep.subr.mxu0 0.0
    %1177 = vmatpush1.msra.mxu0 0.0
    %1178 = vmatprep.subr.mxu0 0.0
    %1179 = vmatpush1.msra.mxu0 0.0
    %1180 = vmatprep.subr.mxu0 0.0
    %1181 = vmatpush1.msra.mxu0 0.0
    %1182 = vmatprep.subr.mxu0 0.0
    %1183 = vmatpush1.msra.mxu0 0.0
    %1184 = vmatprep.subr.mxu0 0.0
    %1185 = vmatpush1.msra.mxu0 0.0
    %1186 = vmatprep.subr.mxu0 0.0
    %1187 = vmatpush1.msra.mxu0 0.0
    %1188 = vmatprep.subr.mxu0 0.0
    %1189 = vmatpush1.msra.mxu0 0.0
    %1190 = vmatprep.subr.mxu0 0.0
    %1191 = vmatpush1.msra.mxu0 0.0
    %1192 = vmatprep.mubr.f32.mxu0 0.0
    %v1193 = vand.u32 %v44, 4294901760
    %1194 = vmatmul.mubr.f32.gmra.mrb[0].mxu0 %v1193
    %v1195 = vpop.f32.mrb[0].mxu0
    %v1196 = vadd.f32 %v1045, %v1195
    %v1197 = vpop.f32.mrb[0].mxu0
    %1198 = vdwg.mxu0
    %1199 = vmatprep.subr.mxu0 0.0
    %v1200 = vand.u32 %v77, 4294901760
    %v1201 = vsub.f32 %v77, %v1200
    %1202 = vmatpush1.msra.mxu0 %v1201
    %1203 = vmatprep.subr.mxu0 0.0
    %v1204 = vand.u32 %v78, 4294901760
    %v1205 = vsub.f32 %v78, %v1204
    %1206 = vmatpush1.msra.mxu0 %v1205
    %1207 = vmatprep.subr.mxu0 0.0
    %v1208 = vand.u32 %v79, 4294901760
    %v1209 = vsub.f32 %v79, %v1208
    %1210 = vmatpush1.msra.mxu0 %v1209
    %1211 = vmatprep.subr.mxu0 0.0
    %v1212 = vand.u32 %v80, 4294901760
    %v1213 = vsub.f32 %v80, %v1212
    %1214 = vmatpush1.msra.mxu0 %v1213
    %1215 = vmatprep.subr.mxu0 0.0
    %v1216 = vand.u32 %v81, 4294901760
    %v1217 = vsub.f32 %v81, %v1216
    %1218 = vmatpush1.msra.mxu0 %v1217
    %1219 = vmatprep.subr.mxu0 0.0
    %v1220 = vand.u32 %v82, 4294901760
    %v1221 = vsub.f32 %v82, %v1220
    %1222 = vmatpush1.msra.mxu0 %v1221
    %1223 = vmatprep.subr.mxu0 0.0
    %v1224 = vand.u32 %v83, 4294901760
    %v1225 = vsub.f32 %v83, %v1224
    %1226 = vmatpush1.msra.mxu0 %v1225
    %1227 = vmatprep.subr.mxu0 0.0
    %v1228 = vand.u32 %v84, 4294901760
    %v1229 = vsub.f32 %v84, %v1228
    %1230 = vmatpush1.msra.mxu0 %v1229
    %1231 = vmatprep.subr.mxu0 0.0
    %v1232 = vand.u32 %v85, 4294901760
    %v1233 = vsub.f32 %v85, %v1232
    %1234 = vmatpush1.msra.mxu0 %v1233
    %1235 = vmatprep.subr.mxu0 0.0
    %v1236 = vand.u32 %v86, 4294901760
    %v1237 = vsub.f32 %v86, %v1236
    %1238 = vmatpush1.msra.mxu0 %v1237
    %1239 = vmatprep.subr.mxu0 0.0
    %v1240 = vand.u32 %v87, 4294901760
    %v1241 = vsub.f32 %v87, %v1240
    %1242 = vmatpush1.msra.mxu0 %v1241
    %1243 = vmatprep.subr.mxu0 0.0
    %v1244 = vand.u32 %v88, 4294901760
    %v1245 = vsub.f32 %v88, %v1244
    %1246 = vmatpush1.msra.mxu0 %v1245
    %1247 = vmatprep.subr.mxu0 0.0
    %v1248 = vand.u32 %v89, 4294901760
    %v1249 = vsub.f32 %v89, %v1248
    %1250 = vmatpush1.msra.mxu0 %v1249
    %1251 = vmatprep.subr.mxu0 0.0
    %v1252 = vand.u32 %v90, 4294901760
    %v1253 = vsub.f32 %v90, %v1252
    %1254 = vmatpush1.msra.mxu0 %v1253
    %1255 = vmatprep.subr.mxu0 0.0
    %v1256 = vand.u32 %v91, 4294901760
    %v1257 = vsub.f32 %v91, %v1256
    %1258 = vmatpush1.msra.mxu0 %v1257
    %1259 = vmatprep.subr.mxu0 0.0
    %v1260 = vand.u32 %v92, 4294901760
    %v1261 = vsub.f32 %v92, %v1260
    %1262 = vmatpush1.msra.mxu0 %v1261
    %1263 = vmatprep.subr.mxu0 0.0
    %1264 = vmatpush1.msra.mxu0 0.0
    %1265 = vmatprep.subr.mxu0 0.0
    %1266 = vmatpush1.msra.mxu0 0.0
    %1267 = vmatprep.subr.mxu0 0.0
    %1268 = vmatpush1.msra.mxu0 0.0
    %1269 = vmatprep.subr.mxu0 0.0
    %1270 = vmatpush1.msra.mxu0 0.0
    %1271 = vmatprep.subr.mxu0 0.0
    %1272 = vmatpush1.msra.mxu0 0.0
    %1273 = vmatprep.subr.mxu0 0.0
    %1274 = vmatpush1.msra.mxu0 0.0
    %1275 = vmatprep.subr.mxu0 0.0
    %1276 = vmatpush1.msra.mxu0 0.0
    %1277 = vmatprep.subr.mxu0 0.0
    %1278 = vmatpush1.msra.mxu0 0.0
    %1279 = vmatprep.subr.mxu0 0.0
    %1280 = vmatpush1.msra.mxu0 0.0
    %1281 = vmatprep.subr.mxu0 0.0
    %1282 = vmatpush1.msra.mxu0 0.0
    %1283 = vmatprep.subr.mxu0 0.0
    %1284 = vmatpush1.msra.mxu0 0.0
    %1285 = vmatprep.subr.mxu0 0.0
    %1286 = vmatpush1.msra.mxu0 0.0
    %1287 = vmatprep.subr.mxu0 0.0
    %1288 = vmatpush1.msra.mxu0 0.0
    %1289 = vmatprep.subr.mxu0 0.0
    %1290 = vmatpush1.msra.mxu0 0.0
    %1291 = vmatprep.subr.mxu0 0.0
    %1292 = vmatpush1.msra.mxu0 0.0
    %1293 = vmatprep.subr.mxu0 0.0
    %1294 = vmatpush1.msra.mxu0 0.0
    %1295 = vmatprep.mubr.f32.mxu0 0.0
    %v1296 = vand.u32 %v44, 4294901760
    %v1297 = vsub.f32 %v44, %v1296
    %1298 = vmatmul.mubr.f32.gmra.mrb[0].mxu0 %v1297
    %v1299 = vpop.f32.mrb[0].mxu0
    %v1300 = vadd.f32 %v1196, %v1299
    %v1301 = vpop.f32.mrb[0].mxu0
    %1302 = vdwg.mxu0
    %1303 = vmatprep.subr.mxu0 0.0
    %v1304 = vand.u32 %v77, 4294901760
    %1305 = vmatpush1.msra.mxu0 %v1304
    %1306 = vmatprep.subr.mxu0 0.0
    %v1307 = vand.u32 %v78, 4294901760
    %1308 = vmatpush1.msra.mxu0 %v1307
    %1309 = vmatprep.subr.mxu0 0.0
    %v1310 = vand.u32 %v79, 4294901760
    %1311 = vmatpush1.msra.mxu0 %v1310
    %1312 = vmatprep.subr.mxu0 0.0
    %v1313 = vand.u32 %v80, 4294901760
    %1314 = vmatpush1.msra.mxu0 %v1313
    %1315 = vmatprep.subr.mxu0 0.0
    %v1316 = vand.u32 %v81, 4294901760
    %1317 = vmatpush1.msra.mxu0 %v1316
    %1318 = vmatprep.subr.mxu0 0.0
    %v1319 = vand.u32 %v82, 4294901760
    %1320 = vmatpush1.msra.mxu0 %v1319
    %1321 = vmatprep.subr.mxu0 0.0
    %v1322 = vand.u32 %v83, 4294901760
    %1323 = vmatpush1.msra.mxu0 %v1322
    %1324 = vmatprep.subr.mxu0 0.0
    %v1325 = vand.u32 %v84, 4294901760
    %1326 = vmatpush1.msra.mxu0 %v1325
    %1327 = vmatprep.subr.mxu0 0.0
    %v1328 = vand.u32 %v85, 4294901760
    %1329 = vmatpush1.msra.mxu0 %v1328
    %1330 = vmatprep.subr.mxu0 0.0
    %v1331 = vand.u32 %v86, 4294901760
    %1332 = vmatpush1.msra.mxu0 %v1331
    %1333 = vmatprep.subr.mxu0 0.0
    %v1334 = vand.u32 %v87, 4294901760
    %1335 = vmatpush1.msra.mxu0 %v1334
    %1336 = vmatprep.subr.mxu0 0.0
    %v1337 = vand.u32 %v88, 4294901760
    %1338 = vmatpush1.msra.mxu0 %v1337
    %1339 = vmatprep.subr.mxu0 0.0
    %v1340 = vand.u32 %v89, 4294901760
    %1341 = vmatpush1.msra.mxu0 %v1340
    %1342 = vmatprep.subr.mxu0 0.0
    %v1343 = vand.u32 %v90, 4294901760
    %1344 = vmatpush1.msra.mxu0 %v1343
    %1345 = vmatprep.subr.mxu0 0.0
    %v1346 = vand.u32 %v91, 4294901760
    %1347 = vmatpush1.msra.mxu0 %v1346
    %1348 = vmatprep.subr.mxu0 0.0
    %v1349 = vand.u32 %v92, 4294901760
    %1350 = vmatpush1.msra.mxu0 %v1349
    %1351 = vmatprep.subr.mxu0 0.0
    %1352 = vmatpush1.msra.mxu0 0.0
    %1353 = vmatprep.subr.mxu0 0.0
    %1354 = vmatpush1.msra.mxu0 0.0
    %1355 = vmatprep.subr.mxu0 0.0
    %1356 = vmatpush1.msra.mxu0 0.0
    %1357 = vmatprep.subr.mxu0 0.0
    %1358 = vmatpush1.msra.mxu0 0.0
    %1359 = vmatprep.subr.mxu0 0.0
    %1360 = vmatpush1.msra.mxu0 0.0
    %1361 = vmatprep.subr.mxu0 0.0
    %1362 = vmatpush1.msra.mxu0 0.0
    %1363 = vmatprep.subr.mxu0 0.0
    %1364 = vmatpush1.msra.mxu0 0.0
    %1365 = vmatprep.subr.mxu0 0.0
    %1366 = vmatpush1.msra.mxu0 0.0
    %1367 = vmatprep.subr.mxu0 0.0
    %1368 = vmatpush1.msra.mxu0 0.0
    %1369 = vmatprep.subr.mxu0 0.0
    %1370 = vmatpush1.msra.mxu0 0.0
    %1371 = vmatprep.subr.mxu0 0.0
    %1372 = vmatpush1.msra.mxu0 0.0
    %1373 = vmatprep.subr.mxu0 0.0
    %1374 = vmatpush1.msra.mxu0 0.0
    %1375 = vmatprep.subr.mxu0 0.0
    %1376 = vmatpush1.msra.mxu0 0.0
    %1377 = vmatprep.subr.mxu0 0.0
    %1378 = vmatpush1.msra.mxu0 0.0
    %1379 = vmatprep.subr.mxu0 0.0
    %1380 = vmatpush1.msra.mxu0 0.0
    %1381 = vmatprep.subr.mxu0 0.0
    %1382 = vmatpush1.msra.mxu0 0.0
    %1383 = vmatprep.mubr.f32.mxu0 0.0
    %v1384 = vand.u32 %v44, 4294901760
    %v1385 = vsub.f32 %v44, %v1384
    %v1386 = vand.u32 %v1385, 4294901760
    %1387 = vmatmul.mubr.f32.gmra.mrb[0].mxu0 %v1386
    %v1388 = vpop.f32.mrb[0].mxu0
    %v1389 = vadd.f32 %v1300, %v1388
    %v1390 = vpop.f32.mrb[0].mxu0
    %1391 = vdwg.mxu0
    %1392 = vmatprep.subr.mxu0 0.0
    %v1393 = vand.u32 %v77, 4294901760
    %v1394 = vsub.f32 %v77, %v1393
    %v1395 = vand.u32 %v1394, 4294901760
    %1396 = vmatpush1.msra.mxu0 %v1395
    %1397 = vmatprep.subr.mxu0 0.0
    %v1398 = vand.u32 %v78, 4294901760
    %v1399 = vsub.f32 %v78, %v1398
    %v1400 = vand.u32 %v1399, 4294901760
    %1401 = vmatpush1.msra.mxu0 %v1400
    %1402 = vmatprep.subr.mxu0 0.0
    %v1403 = vand.u32 %v79, 4294901760
    %v1404 = vsub.f32 %v79, %v1403
    %v1405 = vand.u32 %v1404, 4294901760
    %1406 = vmatpush1.msra.mxu0 %v1405
    %1407 = vmatprep.subr.mxu0 0.0
    %v1408 = vand.u32 %v80, 4294901760
    %v1409 = vsub.f32 %v80, %v1408
    %v1410 = vand.u32 %v1409, 4294901760
    %1411 = vmatpush1.msra.mxu0 %v1410
    %1412 = vmatprep.subr.mxu0 0.0
    %v1413 = vand.u32 %v81, 4294901760
    %v1414 = vsub.f32 %v81, %v1413
    %v1415 = vand.u32 %v1414, 4294901760
    %1416 = vmatpush1.msra.mxu0 %v1415
    %1417 = vmatprep.subr.mxu0 0.0
    %v1418 = vand.u32 %v82, 4294901760
    %v1419 = vsub.f32 %v82, %v1418
    %v1420 = vand.u32 %v1419, 4294901760
    %1421 = vmatpush1.msra.mxu0 %v1420
    %1422 = vmatprep.subr.mxu0 0.0
    %v1423 = vand.u32 %v83, 4294901760
    %v1424 = vsub.f32 %v83, %v1423
    %v1425 = vand.u32 %v1424, 4294901760
    %1426 = vmatpush1.msra.mxu0 %v1425
    %1427 = vmatprep.subr.mxu0 0.0
    %v1428 = vand.u32 %v84, 4294901760
    %v1429 = vsub.f32 %v84, %v1428
    %v1430 = vand.u32 %v1429, 4294901760
    %1431 = vmatpush1.msra.mxu0 %v1430
    %1432 = vmatprep.subr.mxu0 0.0
    %v1433 = vand.u32 %v85, 4294901760
    %v1434 = vsub.f32 %v85, %v1433
    %v1435 = vand.u32 %v1434, 4294901760
    %1436 = vmatpush1.msra.mxu0 %v1435
    %1437 = vmatprep.subr.mxu0 0.0
    %v1438 = vand.u32 %v86, 4294901760
    %v1439 = vsub.f32 %v86, %v1438
    %v1440 = vand.u32 %v1439, 4294901760
    %1441 = vmatpush1.msra.mxu0 %v1440
    %1442 = vmatprep.subr.mxu0 0.0
    %v1443 = vand.u32 %v87, 4294901760
    %v1444 = vsub.f32 %v87, %v1443
    %v1445 = vand.u32 %v1444, 4294901760
    %1446 = vmatpush1.msra.mxu0 %v1445
    %1447 = vmatprep.subr.mxu0 0.0
    %v1448 = vand.u32 %v88, 4294901760
    %v1449 = vsub.f32 %v88, %v1448
    %v1450 = vand.u32 %v1449, 4294901760
    %1451 = vmatpush1.msra.mxu0 %v1450
    %1452 = vmatprep.subr.mxu0 0.0
    %v1453 = vand.u32 %v89, 4294901760
    %v1454 = vsub.f32 %v89, %v1453
    %v1455 = vand.u32 %v1454, 4294901760
    %1456 = vmatpush1.msra.mxu0 %v1455
    %1457 = vmatprep.subr.mxu0 0.0
    %v1458 = vand.u32 %v90, 4294901760
    %v1459 = vsub.f32 %v90, %v1458
    %v1460 = vand.u32 %v1459, 4294901760
    %1461 = vmatpush1.msra.mxu0 %v1460
    %1462 = vmatprep.subr.mxu0 0.0
    %v1463 = vand.u32 %v91, 4294901760
    %v1464 = vsub.f32 %v91, %v1463
    %v1465 = vand.u32 %v1464, 4294901760
    %1466 = vmatpush1.msra.mxu0 %v1465
    %1467 = vmatprep.subr.mxu0 0.0
    %v1468 = vand.u32 %v92, 4294901760
    %v1469 = vsub.f32 %v92, %v1468
    %v1470 = vand.u32 %v1469, 4294901760
    %1471 = vmatpush1.msra.mxu0 %v1470
    %1472 = vmatprep.subr.mxu0 0.0
    %1473 = vmatpush1.msra.mxu0 0.0
    %1474 = vmatprep.subr.mxu0 0.0
    %1475 = vmatpush1.msra.mxu0 0.0
    %1476 = vmatprep.subr.mxu0 0.0
    %1477 = vmatpush1.msra.mxu0 0.0
    %1478 = vmatprep.subr.mxu0 0.0
    %1479 = vmatpush1.msra.mxu0 0.0
    %1480 = vmatprep.subr.mxu0 0.0
    %1481 = vmatpush1.msra.mxu0 0.0
    %1482 = vmatprep.subr.mxu0 0.0
    %1483 = vmatpush1.msra.mxu0 0.0
    %1484 = vmatprep.subr.mxu0 0.0
    %1485 = vmatpush1.msra.mxu0 0.0
    %1486 = vmatprep.subr.mxu0 0.0
    %1487 = vmatpush1.msra.mxu0 0.0
    %1488 = vmatprep.subr.mxu0 0.0
    %1489 = vmatpush1.msra.mxu0 0.0
    %1490 = vmatprep.subr.mxu0 0.0
    %1491 = vmatpush1.msra.mxu0 0.0
    %1492 = vmatprep.subr.mxu0 0.0
    %1493 = vmatpush1.msra.mxu0 0.0
    %1494 = vmatprep.subr.mxu0 0.0
    %1495 = vmatpush1.msra.mxu0 0.0
    %1496 = vmatprep.subr.mxu0 0.0
    %1497 = vmatpush1.msra.mxu0 0.0
    %1498 = vmatprep.subr.mxu0 0.0
    %1499 = vmatpush1.msra.mxu0 0.0
    %1500 = vmatprep.subr.mxu0 0.0
    %1501 = vmatpush1.msra.mxu0 0.0
    %1502 = vmatprep.subr.mxu0 0.0
    %1503 = vmatpush1.msra.mxu0 0.0
    %1504 = vmatprep.mubr.f32.mxu0 0.0
    %v1505 = vand.u32 %v44, 4294901760
    %1506 = vmatmul.mubr.f32.gmra.mrb[0].mxu0 %v1505
    %v1507 = vpop.f32.mrb[0].mxu0
    %v1508 = vadd.f32 %v1389, %v1507
    %v1509 = vpop.f32.mrb[0].mxu0
    %1510 = vdwg.mxu0
    %1511 = vmatprep.subr.mxu0 0.0
    %v1512 = vand.u32 %v77, 4294901760
    %1513 = vmatpush1.msra.mxu0 %v1512
    %1514 = vmatprep.subr.mxu0 0.0
    %v1515 = vand.u32 %v78, 4294901760
    %1516 = vmatpush1.msra.mxu0 %v1515
    %1517 = vmatprep.subr.mxu0 0.0
    %v1518 = vand.u32 %v79, 4294901760
    %1519 = vmatpush1.msra.mxu0 %v1518
    %1520 = vmatprep.subr.mxu0 0.0
    %v1521 = vand.u32 %v80, 4294901760
    %1522 = vmatpush1.msra.mxu0 %v1521
    %1523 = vmatprep.subr.mxu0 0.0
    %v1524 = vand.u32 %v81, 4294901760
    %1525 = vmatpush1.msra.mxu0 %v1524
    %1526 = vmatprep.subr.mxu0 0.0
    %v1527 = vand.u32 %v82, 4294901760
    %1528 = vmatpush1.msra.mxu0 %v1527
    %1529 = vmatprep.subr.mxu0 0.0
    %v1530 = vand.u32 %v83, 4294901760
    %1531 = vmatpush1.msra.mxu0 %v1530
    %1532 = vmatprep.subr.mxu0 0.0
    %v1533 = vand.u32 %v84, 4294901760
    %1534 = vmatpush1.msra.mxu0 %v1533
    %1535 = vmatprep.subr.mxu0 0.0
    %v1536 = vand.u32 %v85, 4294901760
    %1537 = vmatpush1.msra.mxu0 %v1536
    %1538 = vmatprep.subr.mxu0 0.0
    %v1539 = vand.u32 %v86, 4294901760
    %1540 = vmatpush1.msra.mxu0 %v1539
    %1541 = vmatprep.subr.mxu0 0.0
    %v1542 = vand.u32 %v87, 4294901760
    %1543 = vmatpush1.msra.mxu0 %v1542
    %1544 = vmatprep.subr.mxu0 0.0
    %v1545 = vand.u32 %v88, 4294901760
    %1546 = vmatpush1.msra.mxu0 %v1545
    %1547 = vmatprep.subr.mxu0 0.0
    %v1548 = vand.u32 %v89, 4294901760
    %1549 = vmatpush1.msra.mxu0 %v1548
    %1550 = vmatprep.subr.mxu0 0.0
    %v1551 = vand.u32 %v90, 4294901760
    %1552 = vmatpush1.msra.mxu0 %v1551
    %1553 = vmatprep.subr.mxu0 0.0
    %v1554 = vand.u32 %v91, 4294901760
    %1555 = vmatpush1.msra.mxu0 %v1554
    %1556 = vmatprep.subr.mxu0 0.0
    %v1557 = vand.u32 %v92, 4294901760
    %1558 = vmatpush1.msra.mxu0 %v1557
    %1559 = vmatprep.subr.mxu0 0.0
    %1560 = vmatpush1.msra.mxu0 0.0
    %1561 = vmatprep.subr.mxu0 0.0
    %1562 = vmatpush1.msra.mxu0 0.0
    %1563 = vmatprep.subr.mxu0 0.0
    %1564 = vmatpush1.msra.mxu0 0.0
    %1565 = vmatprep.subr.mxu0 0.0
    %1566 = vmatpush1.msra.mxu0 0.0
    %1567 = vmatprep.subr.mxu0 0.0
    %1568 = vmatpush1.msra.mxu0 0.0
    %1569 = vmatprep.subr.mxu0 0.0
    %1570 = vmatpush1.msra.mxu0 0.0
    %1571 = vmatprep.subr.mxu0 0.0
    %1572 = vmatpush1.msra.mxu0 0.0
    %1573 = vmatprep.subr.mxu0 0.0
    %1574 = vmatpush1.msra.mxu0 0.0
    %1575 = vmatprep.subr.mxu0 0.0
    %1576 = vmatpush1.msra.mxu0 0.0
    %1577 = vmatprep.subr.mxu0 0.0
    %1578 = vmatpush1.msra.mxu0 0.0
    %1579 = vmatprep.subr.mxu0 0.0
    %1580 = vmatpush1.msra.mxu0 0.0
    %1581 = vmatprep.subr.mxu0 0.0
    %1582 = vmatpush1.msra.mxu0 0.0
    %1583 = vmatprep.subr.mxu0 0.0
    %1584 = vmatpush1.msra.mxu0 0.0
    %1585 = vmatprep.subr.mxu0 0.0
    %1586 = vmatpush1.msra.mxu0 0.0
    %1587 = vmatprep.subr.mxu0 0.0
    %1588 = vmatpush1.msra.mxu0 0.0
    %1589 = vmatprep.subr.mxu0 0.0
    %1590 = vmatpush1.msra.mxu0 0.0
    %1591 = vmatprep.mubr.f32.mxu0 0.0
    %v1592 = vand.u32 %v44, 4294901760
    %1593 = vmatmul.mubr.f32.gmra.mrb[0].mxu0 %v1592
    %v1594 = vpop.f32.mrb[0].mxu0
    %v1595 = vadd.f32 %v1508, %v1594
    %v1596 = vpop.f32.mrb[0].mxu0
    %1597 = vdwg.mxu0
    %v1598 = vsub.f32 0.0, %v1595
    %v1599 = vmul.f32 %v1598, 1.442695
    %v1600 = vpow.pop %v1599
    %v1601 = vadd.f32 %v1600, 1.0
    %v1602 = vrcp.pop %v1601
    %v1603 = vmul.f32 1.0, %v1602
    %1604 = vst [vmem:[#allocation8] sm:$0xff] %v1603
    // Predicated region
    $region22: #{tpu_custom_call.1} parent=1 // pred_check
      _
    $region23: #{tpu_custom_call.1} parent=1 // pred_check_branch
      %1606 = sbr.rel (0) target = $region25
    $region24: #{tpu_custom_call.1} parent=1 // pred_region
      %s1608 = ssub.s32 128, 128
      %1609 = vsyncadd [#allocation5], %s1608
      %s1611 = sshll.u32 [#allocation8], 4
      %s1612 = int_to_ptr.vmem [resolvable:$true] %s1611
      %1614 = dma.vmem_to_hbm [thread:$0]  %s1612, 128, %s3, [#allocation5]
    $region25: #{tpu_custom_call.1} parent=1 // pred_fallthru
      _
    // Predicated region
    $region26: #{tpu_custom_call.1} parent=1 // pred_check
      _
    $region27: #{tpu_custom_call.1} parent=1 // pred_check_branch
      %1616 = sbr.rel (0) target = $region29
    $region28: #{tpu_custom_call.1} parent=1 // pred_region
      %1617 = dma.done [#allocation5], 128
    $region29: #{tpu_custom_call.1} parent=1 // pred_fallthru
      _
    %1618 = vsyncpa [#allocation4], 1
    %1619 = vsyncpa [#allocation7], 1
    %1620 = vsyncpa [#allocation5], 1

</llo_original>
